<compile_context>
chip_gen: v7x
topology: tpu7x:2x2x1
jax: 0.10.0
libtpu: 0.0.40
codegen_flags: <defaults>
</compile_context>

<pallas_src>
import functools

import jax
import jax.numpy as jnp
from jax.experimental import pallas as pl
from jax.experimental.pallas import tpu as pltpu


# ------------------------------ helpers ------------------------------------ #

def _ds(start, size, stride):
    return pl.ds(start, size) if stride == 1 else pl.ds(start, size, stride)


def _vmem_limit_bytes():
    """Generation-dependent VMEM limit with headroom below physical capacity."""
    cap = 64 * 1024 * 1024
    try:
        info = pltpu.get_tpu_info()
        cap = int(getattr(info, "vmem_capacity_bytes", cap))
    except Exception:
        pass
    limit = min((cap * 3) // 4, 100 * 1024 * 1024)
    return max(limit, 32 * 1024 * 1024)


def _compiler_params():
    return pltpu.CompilerParams(
        dimension_semantics=("parallel",),
        vmem_limit_bytes=_vmem_limit_bytes(),
    )


def bn_fold(gamma, beta, mean, var, eps=1e-5):
    scale = gamma / jnp.sqrt(var + eps)
    bias = beta - mean * scale
    return scale, bias


# ------------------------------ Pallas kernel ------------------------------ #

def _bottleneck_kernel(x_ref, w1_ref, b1_ref, w2_ref, b2_ref, w3_ref, b3_ref,
                       *rest, stride, h, w, ho, wo, cin, planes, has_shortcut):
    """Fully fused Bottleneck forward for one image.

    x_ref : (H, W, Cin) bf16 image
    w1_ref: (Cin, planes) bf16 (BN1 scale folded)      b1_ref: (1, planes) f32
    w2_ref: (9*planes, planes) bf16 (BN2 folded)        b2_ref: (1, planes) f32
    w3_ref: (planes, 4*planes) bf16 (BN3 folded)        b3_ref: (1, 4*planes) f32
    [ws_ref: (Cin, 4*planes) bf16, bs_ref: (1, 4*planes) f32]  (shortcut conv)
    o_ref : (Ho*Wo, 4*planes) bf16
    pad_ref : VMEM (H+2, W+2, planes) f32 scratch       (in-kernel pad=1)
    slab_ref: VMEM (Ho*Wo, 9*planes) bf16 scratch       (im2col slab, one matmul)
    """
    if has_shortcut:
        ws_ref, bs_ref, o_ref, pad_ref, slab_ref = rest
    else:
        o_ref, pad_ref, slab_ref = rest

    # ---- conv1 (1x1) + bn1 + relu, straight from the image block (no HBM). --
    x = x_ref[...]                                     # (H, W, Cin) bf16
    x2d = x.reshape(h * w, cin)
    o1 = jnp.dot(x2d, w1_ref[...], preferred_element_type=jnp.float32)
    o1 = jnp.maximum(o1 + b1_ref[...], 0.0)            # f32 (H*W, planes)

    # ---- pad=1 in VMEM: zero scratch, store interior at offset (1,1). -------
    pad_ref[...] = jnp.zeros_like(pad_ref)
    pad_ref[pl.ds(1, h), pl.ds(1, w), :] = o1.reshape(h, w, planes)

    # ---- build im2col slab and run conv2 as ONE matmul with K = 9*planes. ---
    for t in range(9):
        dy, dx = t // 3, t % 3
        tap = pad_ref[_ds(dy, ho, stride), _ds(dx, wo, stride), :]
        slab_ref[:, t * planes:(t + 1) * planes] = (
            tap.reshape(ho * wo, planes).astype(slab_ref.dtype))
    o2 = jnp.dot(slab_ref[...], w2_ref[...], preferred_element_type=jnp.float32)
    o2 = jnp.maximum(o2 + b2_ref[...], 0.0).astype(jnp.bfloat16)

    # ---- shortcut: strided 1x1 conv + bn (subsample in VMEM), or identity. --
    if has_shortcut:
        if stride == 1:
            xs = x2d
        else:
            xs = x_ref[_ds(0, ho, stride), _ds(0, wo, stride), :]
            xs = xs.reshape(ho * wo, cin)
        sc = jnp.dot(xs, ws_ref[...], preferred_element_type=jnp.float32)
        sc = sc + bs_ref[...]
    else:
        sc = x2d.astype(jnp.float32)                    # identity shortcut

    # ---- conv3 (1x1) + bn3 + residual add + relu (fused epilogue). ----------
    o3 = jnp.dot(o2, w3_ref[...], preferred_element_type=jnp.float32)
    o3 = o3 + b3_ref[...] + sc
    o_ref[...] = jnp.maximum(o3, 0.0).astype(o_ref.dtype)


# ------------------------------ JAX wrapper --------------------------------- #

@functools.partial(jax.jit, static_argnums=(2,))
def bottleneck_forward(x_nchw, p, stride):
    x = jnp.transpose(x_nchw, (0, 2, 3, 1)).astype(jnp.bfloat16)   # NHWC bf16
    n, h, w, cin = x.shape
    planes = p["conv1_w"].shape[0]
    cexp = p["conv3_w"].shape[0]
    ho = (h + 2 - 3) // stride + 1
    wo = (w + 2 - 3) // stride + 1
    has_shortcut = (stride != 1) or (cin != cexp)

    # Fold BN scales into the weight columns; biases stay f32.
    s1, b1 = bn_fold(*p["bn1"])
    s2, b2 = bn_fold(*p["bn2"])
    s3, b3 = bn_fold(*p["bn3"])

    w1 = (p["conv1_w"].reshape(planes, cin).T.astype(jnp.float32)
          * s1[None, :]).astype(jnp.bfloat16)                        # (Cin, planes)
    w2 = (jnp.transpose(p["conv2_w"], (2, 3, 1, 0))
          .reshape(9 * planes, planes).astype(jnp.float32)
          * s2[None, :]).astype(jnp.bfloat16)                        # (9*planes, planes)
    w3 = (p["conv3_w"].reshape(cexp, planes).T.astype(jnp.float32)
          * s3[None, :]).astype(jnp.bfloat16)                        # (planes, 4*planes)
    b1r = b1.reshape(1, planes).astype(jnp.float32)
    b2r = b2.reshape(1, planes).astype(jnp.float32)
    b3r = b3.reshape(1, cexp).astype(jnp.float32)

    args = [x, w1, b1r, w2, b2r, w3, b3r]
    in_specs = [
        pl.BlockSpec((None, h, w, cin), lambda b: (b, 0, 0, 0)),     # one image
        pl.BlockSpec((cin, planes), lambda b: (0, 0)),               # w1 (resident)
        pl.BlockSpec((1, planes), lambda b: (0, 0)),                 # b1
        pl.BlockSpec((9 * planes, planes), lambda b: (0, 0)),        # w2 (resident)
        pl.BlockSpec((1, planes), lambda b: (0, 0)),                 # b2
        pl.BlockSpec((planes, cexp), lambda b: (0, 0)),              # w3 (resident)
        pl.BlockSpec((1, cexp), lambda b: (0, 0)),                   # b3
    ]
    if has_shortcut:
        ss, bs = bn_fold(*p["sc_bn"])
        ws = (p["sc_w"].reshape(cexp, cin).T.astype(jnp.float32)
              * ss[None, :]).astype(jnp.bfloat16)                    # (Cin, 4*planes)
        args += [ws, bs.reshape(1, cexp).astype(jnp.float32)]
        in_specs += [
            pl.BlockSpec((cin, cexp), lambda b: (0, 0)),             # ws (resident)
            pl.BlockSpec((1, cexp), lambda b: (0, 0)),               # bs
        ]

    kernel = functools.partial(
        _bottleneck_kernel, stride=stride, h=h, w=w, ho=ho, wo=wo,
        cin=cin, planes=planes, has_shortcut=has_shortcut)

    out = pl.pallas_call(
        kernel,
        out_shape=jax.ShapeDtypeStruct((n, ho * wo, cexp), jnp.bfloat16),
        grid=(n,),
        in_specs=in_specs,
        out_specs=pl.BlockSpec((None, ho * wo, cexp), lambda b: (b, 0, 0)),
        scratch_shapes=[
            pltpu.VMEM((h + 2, w + 2, planes), jnp.float32),   # padded conv1 out
            pltpu.VMEM((ho * wo, 9 * planes), jnp.bfloat16),   # im2col slab
        ],
        compiler_params=_compiler_params(),
    )(*args)

    out = out.reshape(n, ho, wo, cexp)
    # Upcast to f32 only after the NHWC->NCHW transpose (review: halves bytes).
    return jnp.transpose(out, (0, 3, 1, 2)).astype(jnp.float32)


# ------------------------ deterministic parameters -------------------------- #

def init_params(key, in_planes, planes, stride):
    exp = 4 * planes
    ks = jax.random.split(key, 16)

    def conv_w(k, cout, cin, kh, kw):
        fan_in = cin * kh * kw
        return (jax.random.normal(k, (cout, cin, kh, kw), jnp.float32)
                / jnp.sqrt(float(fan_in)))

    def bn_p(k, c):
        k1, k2, k3, k4 = jax.random.split(k, 4)
        gamma = 1.0 + 0.1 * jax.random.normal(k1, (c,), jnp.float32)
        beta = 0.1 * jax.random.normal(k2, (c,), jnp.float32)
        mean = 0.1 * jax.random.normal(k3, (c,), jnp.float32)
        var = 0.5 + jnp.abs(jax.random.normal(k4, (c,), jnp.float32))
        return (gamma, beta, mean, var)

    p = {
        "conv1_w": conv_w(ks[0], planes, in_planes, 1, 1),
        "bn1": bn_p(ks[1], planes),
        "conv2_w": conv_w(ks[2], planes, planes, 3, 3),
        "bn2": bn_p(ks[3], planes),
        "conv3_w": conv_w(ks[4], exp, planes, 1, 1),
        "bn3": bn_p(ks[5], exp),
    }
    if stride != 1 or in_planes != exp:
        p["sc_w"] = conv_w(ks[6], exp, in_planes, 1, 1)
        p["sc_bn"] = bn_p(ks[7], exp)
    return p


# ----------------------------- pure-JAX reference --------------------------- #

def reference_forward(x, p, stride, eps=1e-5):
    def conv(x, w, s=1, pad=0):
        return jax.lax.conv_general_dilated(
            x, w, (s, s), [(pad, pad), (pad, pad)],
            dimension_numbers=("NCHW", "OIHW", "NCHW"))

    def bn(x, params):
        g, b, m, v = (t[None, :, None, None] for t in params)
        return (x - m) / jnp.sqrt(v + eps) * g + b

    out = jax.nn.relu(bn(conv(x, p["conv1_w"]), p["bn1"]))
    out = jax.nn.relu(bn(conv(out, p["conv2_w"], stride, 1), p["bn2"]))
    out = bn(conv(out, p["conv3_w"]), p["bn3"])
    if "sc_w" in p:
        sc = bn(conv(x, p["sc_w"], stride, 0), p["sc_bn"])
    else:
        sc = x
    return jax.nn.relu(out + sc)


# ---------------------------------- main ------------------------------------ #

if __name__ == "__main__":
    key = jax.random.PRNGKey(0)
    kx, kp1, kp2 = jax.random.split(key, 3)

    in_planes, planes = 4, 4
    x = jax.random.normal(kx, (2, in_planes, 16, 16), jnp.float32)  # NCHW

    ok = True
    for stride, kp in ((1, kp1), (2, kp2)):
        params = init_params(kp, in_planes, planes, stride)
        out = bottleneck_forward(x, params, stride)
        out = jax.block_until_ready(out)
        ref = reference_forward(x, params, stride)
        if out.shape != ref.shape:
            ok = False
            print(f"SHAPE MISMATCH at stride={stride}: {out.shape} vs {ref.shape}")
        # bf16 activations/weights vs f32 reference -> looser tolerance.
        elif not jnp.allclose(out, ref, atol=1e-1, rtol=5e-2):
            ok = False
            print(f"MISMATCH at stride={stride}: "
                  f"max err {jnp.max(jnp.abs(out - ref)):.3e}")

    if ok:
        print("KERNEL_OK")
</pallas_src>

<mosaic_0001>
module attributes {stable_mosaic.version = 11 : i64} {
  func.func @_bottleneck_kernel(%arg0: i32, %arg1: memref<1x16x16x4xbf16, #tpu.memory_space<vmem>>, %arg2: memref<4x4xbf16, #tpu.memory_space<vmem>>, %arg3: memref<1x4xf32, #tpu.memory_space<vmem>>, %arg4: memref<36x4xbf16, #tpu.memory_space<vmem>>, %arg5: memref<1x4xf32, #tpu.memory_space<vmem>>, %arg6: memref<4x16xbf16, #tpu.memory_space<vmem>>, %arg7: memref<1x16xf32, #tpu.memory_space<vmem>>, %arg8: memref<4x16xbf16, #tpu.memory_space<vmem>>, %arg9: memref<1x16xf32, #tpu.memory_space<vmem>>, %arg10: memref<1x256x16xbf16, #tpu.memory_space<vmem>>, %arg11: memref<18x18x4xf32, #tpu.memory_space<vmem>>, %arg12: memref<256x36xbf16, #tpu.memory_space<vmem>>) attributes {dimension_semantics = [#tpu.dimension_semantics<parallel>], iteration_bounds = array<i64: 2>, scalar_prefetch = 0 : i64, scratch_operands = 2 : i64, tpu.core_type = #tpu.core_type<tc>, window_params = [{transform_indices = @transform_0, window_bounds = array<i64: 1, 16, 16, 4>}, {pipeline_mode = #tpu.pipeline_mode<synchronous>, transform_indices = @transform_1, window_bounds = array<i64: 4, 4>}, {pipeline_mode = #tpu.pipeline_mode<synchronous>, transform_indices = @transform_2, window_bounds = array<i64: 1, 4>}, {pipeline_mode = #tpu.pipeline_mode<synchronous>, transform_indices = @transform_3, window_bounds = array<i64: 36, 4>}, {pipeline_mode = #tpu.pipeline_mode<synchronous>, transform_indices = @transform_4, window_bounds = array<i64: 1, 4>}, {pipeline_mode = #tpu.pipeline_mode<synchronous>, transform_indices = @transform_5, window_bounds = array<i64: 4, 16>}, {pipeline_mode = #tpu.pipeline_mode<synchronous>, transform_indices = @transform_6, window_bounds = array<i64: 1, 16>}, {pipeline_mode = #tpu.pipeline_mode<synchronous>, transform_indices = @transform_7, window_bounds = array<i64: 4, 16>}, {pipeline_mode = #tpu.pipeline_mode<synchronous>, transform_indices = @transform_8, window_bounds = array<i64: 1, 16>}, {transform_indices = @transform_9, window_bounds = array<i64: 1, 256, 16>}]} {
    %c0 = arith.constant 0 : index
    %c0_0 = arith.constant 0 : index
    %c0_1 = arith.constant 0 : index
    %c0_2 = arith.constant 0 : index
    %0 = vector.load %arg1[%c0, %c0_0, %c0_1, %c0_2] : memref<1x16x16x4xbf16, #tpu.memory_space<vmem>>, vector<1x16x16x4xbf16>
    %1 = vector.shape_cast %0 : vector<1x16x16x4xbf16> to vector<16x16x4xbf16>
    %2 = vector.shape_cast %1 : vector<16x16x4xbf16> to vector<256x4xbf16>
    %c0_3 = arith.constant 0 : index
    %c0_4 = arith.constant 0 : index
    %3 = vector.load %arg2[%c0_3, %c0_4] : memref<4x4xbf16, #tpu.memory_space<vmem>>, vector<4x4xbf16>
    %cst = arith.constant dense<0.000000e+00> : vector<256x4xf32>
    %4 = tpu.matmul %2, %3, %cst {dimension_numbers = #tpu.dot_dimension_numbers<[1], [0], [0], [1], [0, 0, 1, 1], [], []>} : vector<256x4xbf16>, vector<4x4xbf16>, vector<256x4xf32> -> vector<256x4xf32>
    %c0_5 = arith.constant 0 : index
    %c0_6 = arith.constant 0 : index
    %5 = vector.load %arg3[%c0_5, %c0_6] : memref<1x4xf32, #tpu.memory_space<vmem>>, vector<1x4xf32>
    %6 = vector.broadcast %5 : vector<1x4xf32> to vector<256x4xf32>
    %7 = arith.addf %4, %6 : vector<256x4xf32>
    %cst_7 = arith.constant 0.000000e+00 : f32
    %8 = vector.broadcast %cst_7 : f32 to vector<256x4xf32>
    %9 = arith.maximumf %7, %8 : vector<256x4xf32>
    %cst_8 = arith.constant 0.000000e+00 : f32
    %10 = vector.broadcast %cst_8 : f32 to vector<18x18x4xf32>
    %c0_9 = arith.constant 0 : index
    %c0_10 = arith.constant 0 : index
    %c0_11 = arith.constant 0 : index
    %11 = vector.load %arg11[%c0_9, %c0_10, %c0_11] : memref<18x18x4xf32, #tpu.memory_space<vmem>>, vector<18x18x4xf32>
    tpu.vector_store %arg11[%c0_9, %c0_10, %c0_11], %10 {strides = array<i32>} : memref<18x18x4xf32, #tpu.memory_space<vmem>>, vector<18x18x4xf32>,
    %12 = vector.shape_cast %9 : vector<256x4xf32> to vector<16x16x4xf32>
    %c1 = arith.constant 1 : index
    %c1_12 = arith.constant 1 : index
    %c0_13 = arith.constant 0 : index
    %13 = vector.load %arg11[%c1, %c1_12, %c0_13] : memref<18x18x4xf32, #tpu.memory_space<vmem>>, vector<16x16x4xf32>
    tpu.vector_store %arg11[%c1, %c1_12, %c0_13], %12 {strides = array<i32>} : memref<18x18x4xf32, #tpu.memory_space<vmem>>, vector<16x16x4xf32>,
    %c0_14 = arith.constant 0 : index
    %c0_15 = arith.constant 0 : index
    %c0_16 = arith.constant 0 : index
    %14 = vector.load %arg11[%c0_14, %c0_15, %c0_16] : memref<18x18x4xf32, #tpu.memory_space<vmem>>, vector<16x16x4xf32>
    %15 = vector.shape_cast %14 : vector<16x16x4xf32> to vector<256x4xf32>
    %16 = arith.truncf %15 : vector<256x4xf32> to vector<256x4xbf16>
    %c0_17 = arith.constant 0 : index
    %c0_18 = arith.constant 0 : index
    %17 = vector.load %arg12[%c0_17, %c0_18] : memref<256x36xbf16, #tpu.memory_space<vmem>>, vector<256x4xbf16>
    tpu.vector_store %arg12[%c0_17, %c0_18], %16 {strides = array<i32>} : memref<256x36xbf16, #tpu.memory_space<vmem>>, vector<256x4xbf16>,
    %c0_19 = arith.constant 0 : index
    %c1_20 = arith.constant 1 : index
    %c0_21 = arith.constant 0 : index
    %18 = vector.load %arg11[%c0_19, %c1_20, %c0_21] : memref<18x18x4xf32, #tpu.memory_space<vmem>>, vector<16x16x4xf32>
    %19 = vector.shape_cast %18 : vector<16x16x4xf32> to vector<256x4xf32>
    %20 = arith.truncf %19 : vector<256x4xf32> to vector<256x4xbf16>
    %c0_22 = arith.constant 0 : index
    %c4 = arith.constant 4 : index
    %21 = vector.load %arg12[%c0_22, %c4] : memref<256x36xbf16, #tpu.memory_space<vmem>>, vector<256x4xbf16>
    tpu.vector_store %arg12[%c0_22, %c4], %20 {strides = array<i32>} : memref<256x36xbf16, #tpu.memory_space<vmem>>, vector<256x4xbf16>,
    %c0_23 = arith.constant 0 : index
    %c2 = arith.constant 2 : index
    %c0_24 = arith.constant 0 : index
    %22 = vector.load %arg11[%c0_23, %c2, %c0_24] : memref<18x18x4xf32, #tpu.memory_space<vmem>>, vector<16x16x4xf32>
    %23 = vector.shape_cast %22 : vector<16x16x4xf32> to vector<256x4xf32>
    %24 = arith.truncf %23 : vector<256x4xf32> to vector<256x4xbf16>
    %c0_25 = arith.constant 0 : index
    %c8 = arith.constant 8 : index
    %25 = vector.load %arg12[%c0_25, %c8] : memref<256x36xbf16, #tpu.memory_space<vmem>>, vector<256x4xbf16>
    tpu.vector_store %arg12[%c0_25, %c8], %24 {strides = array<i32>} : memref<256x36xbf16, #tpu.memory_space<vmem>>, vector<256x4xbf16>,
    %c1_26 = arith.constant 1 : index
    %c0_27 = arith.constant 0 : index
    %c0_28 = arith.constant 0 : index
    %26 = vector.load %arg11[%c1_26, %c0_27, %c0_28] : memref<18x18x4xf32, #tpu.memory_space<vmem>>, vector<16x16x4xf32>
    %27 = vector.shape_cast %26 : vector<16x16x4xf32> to vector<256x4xf32>
    %28 = arith.truncf %27 : vector<256x4xf32> to vector<256x4xbf16>
    %c0_29 = arith.constant 0 : index
    %c12 = arith.constant 12 : index
    %29 = vector.load %arg12[%c0_29, %c12] : memref<256x36xbf16, #tpu.memory_space<vmem>>, vector<256x4xbf16>
    tpu.vector_store %arg12[%c0_29, %c12], %28 {strides = array<i32>} : memref<256x36xbf16, #tpu.memory_space<vmem>>, vector<256x4xbf16>,
    %c1_30 = arith.constant 1 : index
    %c1_31 = arith.constant 1 : index
    %c0_32 = arith.constant 0 : index
    %30 = vector.load %arg11[%c1_30, %c1_31, %c0_32] : memref<18x18x4xf32, #tpu.memory_space<vmem>>, vector<16x16x4xf32>
    %31 = vector.shape_cast %30 : vector<16x16x4xf32> to vector<256x4xf32>
    %32 = arith.truncf %31 : vector<256x4xf32> to vector<256x4xbf16>
    %c0_33 = arith.constant 0 : index
    %c16 = arith.constant 16 : index
    %33 = vector.load %arg12[%c0_33, %c16] : memref<256x36xbf16, #tpu.memory_space<vmem>>, vector<256x4xbf16>
    tpu.vector_store %arg12[%c0_33, %c16], %32 {strides = array<i32>} : memref<256x36xbf16, #tpu.memory_space<vmem>>, vector<256x4xbf16>,
    %c1_34 = arith.constant 1 : index
    %c2_35 = arith.constant 2 : index
    %c0_36 = arith.constant 0 : index
    %34 = vector.load %arg11[%c1_34, %c2_35, %c0_36] : memref<18x18x4xf32, #tpu.memory_space<vmem>>, vector<16x16x4xf32>
    %35 = vector.shape_cast %34 : vector<16x16x4xf32> to vector<256x4xf32>
    %36 = arith.truncf %35 : vector<256x4xf32> to vector<256x4xbf16>
    %c0_37 = arith.constant 0 : index
    %c20 = arith.constant 20 : index
    %37 = vector.load %arg12[%c0_37, %c20] : memref<256x36xbf16, #tpu.memory_space<vmem>>, vector<256x4xbf16>
    tpu.vector_store %arg12[%c0_37, %c20], %36 {strides = array<i32>} : memref<256x36xbf16, #tpu.memory_space<vmem>>, vector<256x4xbf16>,
    %c2_38 = arith.constant 2 : index
    %c0_39 = arith.constant 0 : index
    %c0_40 = arith.constant 0 : index
    %38 = vector.load %arg11[%c2_38, %c0_39, %c0_40] : memref<18x18x4xf32, #tpu.memory_space<vmem>>, vector<16x16x4xf32>
    %39 = vector.shape_cast %38 : vector<16x16x4xf32> to vector<256x4xf32>
    %40 = arith.truncf %39 : vector<256x4xf32> to vector<256x4xbf16>
    %c0_41 = arith.constant 0 : index
    %c24 = arith.constant 24 : index
    %41 = vector.load %arg12[%c0_41, %c24] : memref<256x36xbf16, #tpu.memory_space<vmem>>, vector<256x4xbf16>
    tpu.vector_store %arg12[%c0_41, %c24], %40 {strides = array<i32>} : memref<256x36xbf16, #tpu.memory_space<vmem>>, vector<256x4xbf16>,
    %c2_42 = arith.constant 2 : index
    %c1_43 = arith.constant 1 : index
    %c0_44 = arith.constant 0 : index
    %42 = vector.load %arg11[%c2_42, %c1_43, %c0_44] : memref<18x18x4xf32, #tpu.memory_space<vmem>>, vector<16x16x4xf32>
    %43 = vector.shape_cast %42 : vector<16x16x4xf32> to vector<256x4xf32>
    %44 = arith.truncf %43 : vector<256x4xf32> to vector<256x4xbf16>
    %c0_45 = arith.constant 0 : index
    %c28 = arith.constant 28 : index
    %45 = vector.load %arg12[%c0_45, %c28] : memref<256x36xbf16, #tpu.memory_space<vmem>>, vector<256x4xbf16>
    tpu.vector_store %arg12[%c0_45, %c28], %44 {strides = array<i32>} : memref<256x36xbf16, #tpu.memory_space<vmem>>, vector<256x4xbf16>,
    %c2_46 = arith.constant 2 : index
    %c2_47 = arith.constant 2 : index
    %c0_48 = arith.constant 0 : index
    %46 = vector.load %arg11[%c2_46, %c2_47, %c0_48] : memref<18x18x4xf32, #tpu.memory_space<vmem>>, vector<16x16x4xf32>
    %47 = vector.shape_cast %46 : vector<16x16x4xf32> to vector<256x4xf32>
    %48 = arith.truncf %47 : vector<256x4xf32> to vector<256x4xbf16>
    %c0_49 = arith.constant 0 : index
    %c32 = arith.constant 32 : index
    %49 = vector.load %arg12[%c0_49, %c32] : memref<256x36xbf16, #tpu.memory_space<vmem>>, vector<256x4xbf16>
    tpu.vector_store %arg12[%c0_49, %c32], %48 {strides = array<i32>} : memref<256x36xbf16, #tpu.memory_space<vmem>>, vector<256x4xbf16>,
    %c0_50 = arith.constant 0 : index
    %c0_51 = arith.constant 0 : index
    %50 = vector.load %arg12[%c0_50, %c0_51] : memref<256x36xbf16, #tpu.memory_space<vmem>>, vector<256x36xbf16>
    %c0_52 = arith.constant 0 : index
    %c0_53 = arith.constant 0 : index
    %51 = vector.load %arg4[%c0_52, %c0_53] : memref<36x4xbf16, #tpu.memory_space<vmem>>, vector<36x4xbf16>
    %cst_54 = arith.constant dense<0.000000e+00> : vector<256x4xf32>
    %52 = tpu.matmul %50, %51, %cst_54 {dimension_numbers = #tpu.dot_dimension_numbers<[1], [0], [0], [1], [0, 0, 1, 1], [], []>} : vector<256x36xbf16>, vector<36x4xbf16>, vector<256x4xf32> -> vector<256x4xf32>
    %c0_55 = arith.constant 0 : index
    %c0_56 = arith.constant 0 : index
    %53 = vector.load %arg5[%c0_55, %c0_56] : memref<1x4xf32, #tpu.memory_space<vmem>>, vector<1x4xf32>
    %54 = vector.broadcast %53 : vector<1x4xf32> to vector<256x4xf32>
    %55 = arith.addf %52, %54 : vector<256x4xf32>
    %cst_57 = arith.constant 0.000000e+00 : f32
    %56 = vector.broadcast %cst_57 : f32 to vector<256x4xf32>
    %57 = arith.maximumf %55, %56 : vector<256x4xf32>
    %58 = arith.truncf %57 : vector<256x4xf32> to vector<256x4xbf16>
    %c0_58 = arith.constant 0 : index
    %c0_59 = arith.constant 0 : index
    %59 = vector.load %arg8[%c0_58, %c0_59] : memref<4x16xbf16, #tpu.memory_space<vmem>>, vector<4x16xbf16>
    %cst_60 = arith.constant dense<0.000000e+00> : vector<256x16xf32>
    %60 = tpu.matmul %2, %59, %cst_60 {dimension_numbers = #tpu.dot_dimension_numbers<[1], [0], [0], [1], [0, 0, 1, 1], [], []>} : vector<256x4xbf16>, vector<4x16xbf16>, vector<256x16xf32> -> vector<256x16xf32>
    %c0_61 = arith.constant 0 : index
    %c0_62 = arith.constant 0 : index
    %61 = vector.load %arg9[%c0_61, %c0_62] : memref<1x16xf32, #tpu.memory_space<vmem>>, vector<1x16xf32>
    %62 = vector.broadcast %61 : vector<1x16xf32> to vector<256x16xf32>
    %63 = arith.addf %60, %62 : vector<256x16xf32>
    %c0_63 = arith.constant 0 : index
    %c0_64 = arith.constant 0 : index
    %64 = vector.load %arg6[%c0_63, %c0_64] : memref<4x16xbf16, #tpu.memory_space<vmem>>, vector<4x16xbf16>
    %cst_65 = arith.constant dense<0.000000e+00> : vector<256x16xf32>
    %65 = tpu.matmul %58, %64, %cst_65 {dimension_numbers = #tpu.dot_dimension_numbers<[1], [0], [0], [1], [0, 0, 1, 1], [], []>} : vector<256x4xbf16>, vector<4x16xbf16>, vector<256x16xf32> -> vector<256x16xf32>
    %c0_66 = arith.constant 0 : index
    %c0_67 = arith.constant 0 : index
    %66 = vector.load %arg7[%c0_66, %c0_67] : memref<1x16xf32, #tpu.memory_space<vmem>>, vector<1x16xf32>
    %67 = vector.broadcast %66 : vector<1x16xf32> to vector<256x16xf32>
    %68 = arith.addf %65, %67 : vector<256x16xf32>
    %69 = arith.addf %68, %63 : vector<256x16xf32>
    %cst_68 = arith.constant 0.000000e+00 : f32
    %70 = vector.broadcast %cst_68 : f32 to vector<256x16xf32>
    %71 = arith.maximumf %69, %70 : vector<256x16xf32>
    %72 = arith.truncf %71 : vector<256x16xf32> to vector<256x16xbf16>
    %c0_69 = arith.constant 0 : index
    %c0_70 = arith.constant 0 : index
    %c0_71 = arith.constant 0 : index
    %73 = vector.load %arg10[%c0_69, %c0_70, %c0_71] : memref<1x256x16xbf16, #tpu.memory_space<vmem>>, vector<1x256x16xbf16>
    %74 = vector.shape_cast %73 : vector<1x256x16xbf16> to vector<256x16xbf16>
    %75 = vector.shape_cast %72 : vector<256x16xbf16> to vector<1x256x16xbf16>
    tpu.vector_store %arg10[%c0_69, %c0_70, %c0_71], %75 {strides = array<i32>} : memref<1x256x16xbf16, #tpu.memory_space<vmem>>, vector<1x256x16xbf16>,
    return
  }
  func.func @transform_0(%arg0: i32) -> (i32, i32, i32, i32) {
    %c0_i32 = arith.constant 0 : i32
    %c0_i32_0 = arith.constant 0 : i32
    %c0_i32_1 = arith.constant 0 : i32
    %c0_i32_2 = arith.constant 0 : i32
    return %arg0, %c0_i32, %c0_i32_0, %c0_i32_1 : i32, i32, i32, i32
  }
  func.func @transform_1(%arg0: i32) -> (i32, i32) {
    %c0_i32 = arith.constant 0 : i32
    %c0_i32_0 = arith.constant 0 : i32
    %c0_i32_1 = arith.constant 0 : i32
    return %c0_i32, %c0_i32_0 : i32, i32
  }
  func.func @transform_2(%arg0: i32) -> (i32, i32) {
    %c0_i32 = arith.constant 0 : i32
    %c0_i32_0 = arith.constant 0 : i32
    %c0_i32_1 = arith.constant 0 : i32
    return %c0_i32, %c0_i32_0 : i32, i32
  }
  func.func @transform_3(%arg0: i32) -> (i32, i32) {
    %c0_i32 = arith.constant 0 : i32
    %c0_i32_0 = arith.constant 0 : i32
    %c0_i32_1 = arith.constant 0 : i32
    return %c0_i32, %c0_i32_0 : i32, i32
  }
  func.func @transform_4(%arg0: i32) -> (i32, i32) {
    %c0_i32 = arith.constant 0 : i32
    %c0_i32_0 = arith.constant 0 : i32
    %c0_i32_1 = arith.constant 0 : i32
    return %c0_i32, %c0_i32_0 : i32, i32
  }
  func.func @transform_5(%arg0: i32) -> (i32, i32) {
    %c0_i32 = arith.constant 0 : i32
    %c0_i32_0 = arith.constant 0 : i32
    %c0_i32_1 = arith.constant 0 : i32
    return %c0_i32, %c0_i32_0 : i32, i32
  }
  func.func @transform_6(%arg0: i32) -> (i32, i32) {
    %c0_i32 = arith.constant 0 : i32
    %c0_i32_0 = arith.constant 0 : i32
    %c0_i32_1 = arith.constant 0 : i32
    return %c0_i32, %c0_i32_0 : i32, i32
  }
  func.func @transform_7(%arg0: i32) -> (i32, i32) {
    %c0_i32 = arith.constant 0 : i32
    %c0_i32_0 = arith.constant 0 : i32
    %c0_i32_1 = arith.constant 0 : i32
    return %c0_i32, %c0_i32_0 : i32, i32
  }
  func.func @transform_8(%arg0: i32) -> (i32, i32) {
    %c0_i32 = arith.constant 0 : i32
    %c0_i32_0 = arith.constant 0 : i32
    %c0_i32_1 = arith.constant 0 : i32
    return %c0_i32, %c0_i32_0 : i32, i32
  }
  func.func @transform_9(%arg0: i32) -> (i32, i32, i32) {
    %c0_i32 = arith.constant 0 : i32
    %c0_i32_0 = arith.constant 0 : i32
    %c0_i32_1 = arith.constant 0 : i32
    return %arg0, %c0_i32, %c0_i32_0 : i32, i32, i32
  }
}

</mosaic_0001>

<llo_original>
// kernel: bottleneck_forward.1
$region0: #{bottleneck_forward.1}
  #allocation0 [shape = 'u32[]', space=smem, size = 0x4, offset = 0x4, fixed_abs, tag = 'smem constant byte address 0x4 - core index']
  #allocation1 [shape = 'u32[144,128]{1,0:T(1,128)}', space=vmem, size = 0x12000, scoped, tag = 'internal scratch']
  #allocation2 [shape = 'f32[18,18,4]{2,1,0:T(8,128)}', space=vmem, size = 0x36000, scoped, tag = 'scratch operand']
  #allocation3 [shape = 'bf16[256,36]{1,0:T(16,128)(2,1)}', space=vmem, size = 0x10000, scoped, tag = 'scratch operand']
  %s0 = inlined_call_operand.vmem [shape: bf16[2,16,16,4], index: 0, kind: input, shape index: {}]
  %s1 = inlined_call_operand.vmem [shape: bf16[4,4], index: 1, kind: input, shape index: {}]
  %s2 = inlined_call_operand.vmem [shape: f32[1,4], index: 2, kind: input, shape index: {}]
  %s3 = inlined_call_operand.vmem [shape: bf16[36,4], index: 3, kind: input, shape index: {}]
  %s4 = inlined_call_operand.vmem [shape: f32[1,4], index: 4, kind: input, shape index: {}]
  %s5 = inlined_call_operand.vmem [shape: bf16[4,16], index: 5, kind: input, shape index: {}]
  %s6 = inlined_call_operand.vmem [shape: f32[1,16], index: 6, kind: input, shape index: {}]
  %s7 = inlined_call_operand.vmem [shape: bf16[4,16], index: 7, kind: input, shape index: {}]
  %s8 = inlined_call_operand.vmem [shape: f32[1,16], index: 8, kind: input, shape index: {}]
  %s9 = inlined_call_operand.vmem [shape: bf16[2,256,16], index: 9, kind: output, shape index: {}]
  %s10 = sld [smem:[#allocation0]]
  $region69: #{bottleneck_forward.1} parent=0
    _
  %s12 = ssub.s32 1, %s10
  %s13 = scalar_select 0, %s12, %s10
  loop: start=0, step=1, limit=4
  $region2: #{bottleneck_forward.1} parent=0 // loop_pre_header
    _
  $region3: #{bottleneck_forward.1} parent=0 // loop_header
    %s15 = sphi 0, %s19
    %p16 = scmp.ge.s32.totalorder %s15, 4
    %s25 = sphi 0, %s27
    %s28 = sphi 0, %s25
    %s29 = sphi 0, %s28
    %s45 = sphi 0, %s29
    %s49 = sphi 0, %s49
    %s51 = sphi 0, %s49
    %s52 = sphi 0, %s51
    %s66 = sphi 0, %s52
    %s70 = sphi 0, %s70
    %s72 = sphi 0, %s70
    %s73 = sphi 0, %s72
    %s87 = sphi 0, %s73
    %s91 = sphi 0, %s91
    %s93 = sphi 0, %s91
    %s94 = sphi 0, %s93
    %s108 = sphi 0, %s94
    %s112 = sphi 0, %s112
    %s114 = sphi 0, %s112
    %s115 = sphi 0, %s114
    %s129 = sphi 0, %s115
    %s133 = sphi 0, %s133
    %s135 = sphi 0, %s133
    %s136 = sphi 0, %s135
    %s150 = sphi 0, %s136
    %s154 = sphi 0, %s154
    %s156 = sphi 0, %s154
    %s157 = sphi 0, %s156
    %s171 = sphi 0, %s157
    %s175 = sphi 0, %s175
    %s177 = sphi 0, %s175
    %s178 = sphi 0, %s177
    %s192 = sphi 0, %s178
    %s196 = sphi 0, %s196
    %s198 = sphi 0, %s196
    %s199 = sphi 0, %s198
    %s213 = sphi 0, %s199
    %s219 = sphi 0, %s221
    %s222 = sphi 0, %s219
    %s223 = sphi 0, %s222
    %s239 = sphi 0, %s223
  $region4: #{bottleneck_forward.1} parent=0 // loop_header_branch
    %18 = sbr.rel (%p16) target = $region8
  $region5: #{bottleneck_forward.1} parent=0 // loop_body
    %s20 = ssub.s32 %s15, 1
    %s21 = ssub.s32 %s15, 2
    %s22 = sadd.s32 %s15, 1
    %s23 = ssub.s32 %s15, %s22
    %p24 = scmp.eq.s32.totalorder %s23, 0
    %s26 = sadd.s32 %s25, 1
    %s27 = scalar_select %p24, %s25, %s26
    %p30 = pneg %p24
    %p31 = scmp.eq.s32.totalorder %s15, 1
    %p32 = por %p30, %p31
    %p33 = scmp.ne.s32.totalorder %s25, %s28
    %p34 = scmp.eq.s32.totalorder %s15, 0
    %p35 = por %p33, %p34
    %p36 = scmp.ne.s32.totalorder %s25, %s28
    %p37 = scmp.eq.s32.totalorder %s20, 1
    %p38 = por %p36, %p37
    %p39 = scmp.ne.s32.totalorder %s28, %s29
    %p40 = scmp.eq.s32.totalorder %s20, 0
    %p41 = por %p39, %p40
    %p42 = scmp.ne.s32.totalorder %s28, %s29
    %p43 = scmp.eq.s32.totalorder %s21, 1
    %p44 = por %p42, %p43
    %p46 = scmp.ne.s32.totalorder %s29, %s45
    %p47 = scmp.eq.s32.totalorder %s21, 0
    %p48 = por %p46, %p47
    %s50 = sadd.s32 %s49, 1
    %p53 = scmp.eq.s32.totalorder %s15, 1
    %p54 = scmp.ne.s32.totalorder %s49, %s51
    %p55 = scmp.eq.s32.totalorder %s15, 0
    %p56 = por %p54, %p55
    %p57 = scmp.ne.s32.totalorder %s49, %s51
    %p58 = scmp.eq.s32.totalorder %s20, 1
    %p59 = por %p57, %p58
    %p60 = scmp.ne.s32.totalorder %s51, %s52
    %p61 = scmp.eq.s32.totalorder %s20, 0
    %p62 = por %p60, %p61
    %p63 = scmp.ne.s32.totalorder %s51, %s52
    %p64 = scmp.eq.s32.totalorder %s21, 1
    %p65 = por %p63, %p64
    %p67 = scmp.ne.s32.totalorder %s52, %s66
    %p68 = scmp.eq.s32.totalorder %s21, 0
    %p69 = por %p67, %p68
    %s71 = sadd.s32 %s70, 1
    %p74 = scmp.eq.s32.totalorder %s15, 1
    %p75 = scmp.ne.s32.totalorder %s70, %s72
    %p76 = scmp.eq.s32.totalorder %s15, 0
    %p77 = por %p75, %p76
    %p78 = scmp.ne.s32.totalorder %s70, %s72
    %p79 = scmp.eq.s32.totalorder %s20, 1
    %p80 = por %p78, %p79
    %p81 = scmp.ne.s32.totalorder %s72, %s73
    %p82 = scmp.eq.s32.totalorder %s20, 0
    %p83 = por %p81, %p82
    %p84 = scmp.ne.s32.totalorder %s72, %s73
    %p85 = scmp.eq.s32.totalorder %s21, 1
    %p86 = por %p84, %p85
    %p88 = scmp.ne.s32.totalorder %s73, %s87
    %p89 = scmp.eq.s32.totalorder %s21, 0
    %p90 = por %p88, %p89
    %s92 = sadd.s32 %s91, 1
    %p95 = scmp.eq.s32.totalorder %s15, 1
    %p96 = scmp.ne.s32.totalorder %s91, %s93
    %p97 = scmp.eq.s32.totalorder %s15, 0
    %p98 = por %p96, %p97
    %p99 = scmp.ne.s32.totalorder %s91, %s93
    %p100 = scmp.eq.s32.totalorder %s20, 1
    %p101 = por %p99, %p100
    %p102 = scmp.ne.s32.totalorder %s93, %s94
    %p103 = scmp.eq.s32.totalorder %s20, 0
    %p104 = por %p102, %p103
    %p105 = scmp.ne.s32.totalorder %s93, %s94
    %p106 = scmp.eq.s32.totalorder %s21, 1
    %p107 = por %p105, %p106
    %p109 = scmp.ne.s32.totalorder %s94, %s108
    %p110 = scmp.eq.s32.totalorder %s21, 0
    %p111 = por %p109, %p110
    %s113 = sadd.s32 %s112, 1
    %p116 = scmp.eq.s32.totalorder %s15, 1
    %p117 = scmp.ne.s32.totalorder %s112, %s114
    %p118 = scmp.eq.s32.totalorder %s15, 0
    %p119 = por %p117, %p118
    %p120 = scmp.ne.s32.totalorder %s112, %s114
    %p121 = scmp.eq.s32.totalorder %s20, 1
    %p122 = por %p120, %p121
    %p123 = scmp.ne.s32.totalorder %s114, %s115
    %p124 = scmp.eq.s32.totalorder %s20, 0
    %p125 = por %p123, %p124
    %p126 = scmp.ne.s32.totalorder %s114, %s115
    %p127 = scmp.eq.s32.totalorder %s21, 1
    %p128 = por %p126, %p127
    %p130 = scmp.ne.s32.totalorder %s115, %s129
    %p131 = scmp.eq.s32.totalorder %s21, 0
    %p132 = por %p130, %p131
    %s134 = sadd.s32 %s133, 1
    %p137 = scmp.eq.s32.totalorder %s15, 1
    %p138 = scmp.ne.s32.totalorder %s133, %s135
    %p139 = scmp.eq.s32.totalorder %s15, 0
    %p140 = por %p138, %p139
    %p141 = scmp.ne.s32.totalorder %s133, %s135
    %p142 = scmp.eq.s32.totalorder %s20, 1
    %p143 = por %p141, %p142
    %p144 = scmp.ne.s32.totalorder %s135, %s136
    %p145 = scmp.eq.s32.totalorder %s20, 0
    %p146 = por %p144, %p145
    %p147 = scmp.ne.s32.totalorder %s135, %s136
    %p148 = scmp.eq.s32.totalorder %s21, 1
    %p149 = por %p147, %p148
    %p151 = scmp.ne.s32.totalorder %s136, %s150
    %p152 = scmp.eq.s32.totalorder %s21, 0
    %p153 = por %p151, %p152
    %s155 = sadd.s32 %s154, 1
    %p158 = scmp.eq.s32.totalorder %s15, 1
    %p159 = scmp.ne.s32.totalorder %s154, %s156
    %p160 = scmp.eq.s32.totalorder %s15, 0
    %p161 = por %p159, %p160
    %p162 = scmp.ne.s32.totalorder %s154, %s156
    %p163 = scmp.eq.s32.totalorder %s20, 1
    %p164 = por %p162, %p163
    %p165 = scmp.ne.s32.totalorder %s156, %s157
    %p166 = scmp.eq.s32.totalorder %s20, 0
    %p167 = por %p165, %p166
    %p168 = scmp.ne.s32.totalorder %s156, %s157
    %p169 = scmp.eq.s32.totalorder %s21, 1
    %p170 = por %p168, %p169
    %p172 = scmp.ne.s32.totalorder %s157, %s171
    %p173 = scmp.eq.s32.totalorder %s21, 0
    %p174 = por %p172, %p173
    %s176 = sadd.s32 %s175, 1
    %p179 = scmp.eq.s32.totalorder %s15, 1
    %p180 = scmp.ne.s32.totalorder %s175, %s177
    %p181 = scmp.eq.s32.totalorder %s15, 0
    %p182 = por %p180, %p181
    %p183 = scmp.ne.s32.totalorder %s175, %s177
    %p184 = scmp.eq.s32.totalorder %s20, 1
    %p185 = por %p183, %p184
    %p186 = scmp.ne.s32.totalorder %s177, %s178
    %p187 = scmp.eq.s32.totalorder %s20, 0
    %p188 = por %p186, %p187
    %p189 = scmp.ne.s32.totalorder %s177, %s178
    %p190 = scmp.eq.s32.totalorder %s21, 1
    %p191 = por %p189, %p190
    %p193 = scmp.ne.s32.totalorder %s178, %s192
    %p194 = scmp.eq.s32.totalorder %s21, 0
    %p195 = por %p193, %p194
    %s197 = sadd.s32 %s196, 1
    %p200 = scmp.eq.s32.totalorder %s15, 1
    %p201 = scmp.ne.s32.totalorder %s196, %s198
    %p202 = scmp.eq.s32.totalorder %s15, 0
    %p203 = por %p201, %p202
    %p204 = scmp.ne.s32.totalorder %s196, %s198
    %p205 = scmp.eq.s32.totalorder %s20, 1
    %p206 = por %p204, %p205
    %p207 = scmp.ne.s32.totalorder %s198, %s199
    %p208 = scmp.eq.s32.totalorder %s20, 0
    %p209 = por %p207, %p208
    %p210 = scmp.ne.s32.totalorder %s198, %s199
    %p211 = scmp.eq.s32.totalorder %s21, 1
    %p212 = por %p210, %p211
    %p214 = scmp.ne.s32.totalorder %s199, %s213
    %p215 = scmp.eq.s32.totalorder %s21, 0
    %p216 = por %p214, %p215
    %s217 = ssub.s32 %s15, %s22
    %p218 = scmp.eq.s32.totalorder %s217, 0
    %s220 = sadd.s32 %s219, 1
    %s221 = scalar_select %p218, %s219, %s220
    %p224 = pneg %p218
    %p225 = scmp.eq.s32.totalorder %s15, 1
    %p226 = por %p224, %p225
    %p227 = scmp.ne.s32.totalorder %s219, %s222
    %p228 = scmp.eq.s32.totalorder %s15, 0
    %p229 = por %p227, %p228
    %p230 = scmp.ne.s32.totalorder %s219, %s222
    %p231 = scmp.eq.s32.totalorder %s20, 1
    %p232 = por %p230, %p231
    %p233 = scmp.ne.s32.totalorder %s222, %s223
    %p234 = scmp.eq.s32.totalorder %s20, 0
    %p235 = por %p233, %p234
    %p236 = scmp.ne.s32.totalorder %s222, %s223
    %p237 = scmp.eq.s32.totalorder %s21, 1
    %p238 = por %p236, %p237
    %p240 = scmp.ne.s32.totalorder %s223, %s239
    %p241 = scmp.eq.s32.totalorder %s21, 0
    %p242 = por %p240, %p241
    %p243 = scmp.le.s32.totalorder 1, %s15
    %p244 = scmp.lt.s32.totalorder %s15, 3
    %p245 = pnand %p243, %p244
    %p246 = pneg %p245
    // Predicated region
    $region9: #{bottleneck_forward.1} parent=5 // pred_check
      _
    $region10: #{bottleneck_forward.1} parent=5 // pred_check_branch
      %248 = sbr.rel (%p245) target = $region12
    $region11: #{bottleneck_forward.1} parent=5 // pred_region
      %s249 = ssub.s32 %s15, 1
      // Predicated region
      $region13: #{bottleneck_forward.1} parent=11 // pred_check
        %p250 = pneg %p62
      $region14: #{bottleneck_forward.1} parent=11 // pred_check_branch
        %252 = sbr.rel (%p250) target = $region16
      $region15: #{bottleneck_forward.1} parent=11 // pred_region
        _
      $region16: #{bottleneck_forward.1} parent=11 // pred_fallthru
        _
      // Predicated region
      $region17: #{bottleneck_forward.1} parent=11 // pred_check
        %p253 = pneg %p83
      $region18: #{bottleneck_forward.1} parent=11 // pred_check_branch
        %255 = sbr.rel (%p253) target = $region20
      $region19: #{bottleneck_forward.1} parent=11 // pred_region
        _
      $region20: #{bottleneck_forward.1} parent=11 // pred_fallthru
        _
      // Predicated region
      $region21: #{bottleneck_forward.1} parent=11 // pred_check
        %p256 = pneg %p104
      $region22: #{bottleneck_forward.1} parent=11 // pred_check_branch
        %258 = sbr.rel (%p256) target = $region24
      $region23: #{bottleneck_forward.1} parent=11 // pred_region
        _
      $region24: #{bottleneck_forward.1} parent=11 // pred_fallthru
        _
      // Predicated region
      $region25: #{bottleneck_forward.1} parent=11 // pred_check
        %p259 = pneg %p125
      $region26: #{bottleneck_forward.1} parent=11 // pred_check_branch
        %261 = sbr.rel (%p259) target = $region28
      $region27: #{bottleneck_forward.1} parent=11 // pred_region
        _
      $region28: #{bottleneck_forward.1} parent=11 // pred_fallthru
        _
      // Predicated region
      $region29: #{bottleneck_forward.1} parent=11 // pred_check
        %p262 = pneg %p146
      $region30: #{bottleneck_forward.1} parent=11 // pred_check_branch
        %264 = sbr.rel (%p262) target = $region32
      $region31: #{bottleneck_forward.1} parent=11 // pred_region
        _
      $region32: #{bottleneck_forward.1} parent=11 // pred_fallthru
        _
      // Predicated region
      $region33: #{bottleneck_forward.1} parent=11 // pred_check
        %p265 = pneg %p167
      $region34: #{bottleneck_forward.1} parent=11 // pred_check_branch
        %267 = sbr.rel (%p265) target = $region36
      $region35: #{bottleneck_forward.1} parent=11 // pred_region
        _
      $region36: #{bottleneck_forward.1} parent=11 // pred_fallthru
        _
      // Predicated region
      $region37: #{bottleneck_forward.1} parent=11 // pred_check
        %p268 = pneg %p188
      $region38: #{bottleneck_forward.1} parent=11 // pred_check_branch
        %270 = sbr.rel (%p268) target = $region40
      $region39: #{bottleneck_forward.1} parent=11 // pred_region
        _
      $region40: #{bottleneck_forward.1} parent=11 // pred_fallthru
        _
      // Predicated region
      $region41: #{bottleneck_forward.1} parent=11 // pred_check
        %p271 = pneg %p209
      $region42: #{bottleneck_forward.1} parent=11 // pred_check_branch
        %273 = sbr.rel (%p271) target = $region44
      $region43: #{bottleneck_forward.1} parent=11 // pred_region
        _
      $region44: #{bottleneck_forward.1} parent=11 // pred_fallthru
        _
    $region12: #{bottleneck_forward.1} parent=5 // pred_fallthru
      _
    %p274 = scmp.lt.s32.totalorder %s15, 2
    // Predicated region
    $region45: #{bottleneck_forward.1} parent=5 // pred_check
      %p275 = pneg %p274
    $region46: #{bottleneck_forward.1} parent=5 // pred_check_branch
      %277 = sbr.rel (%p275) target = $region48
    $region47: #{bottleneck_forward.1} parent=5 // pred_region
      // Predicated region
      $region49: #{bottleneck_forward.1} parent=47 // pred_check
        %p278 = pneg %p35
      $region50: #{bottleneck_forward.1} parent=47 // pred_check_branch
        %280 = sbr.rel (%p278) target = $region52
      $region51: #{bottleneck_forward.1} parent=47 // pred_region
        %p281 = scmp.lt.s32.totalorder %s15, 1
        %s282 = scalar_select %p281, %s15, 1
        %s283 = smul.addr %s282, 32
        %s284 = smul.addr %s283, 4
        %s285 = scalar_lea.vmem %s0, %s284
      $region52: #{bottleneck_forward.1} parent=47 // pred_fallthru
        _
    $region48: #{bottleneck_forward.1} parent=5 // pred_fallthru
      _
    %p286 = scmp.le.s32.totalorder 1, %s15
    %p287 = scmp.lt.s32.totalorder %s15, 3
    %p288 = pnand %p286, %p287
    %p289 = pneg %p288
    // Predicated region
    $region53: #{bottleneck_forward.1} parent=5 // pred_check
      _
    $region54: #{bottleneck_forward.1} parent=5 // pred_check_branch
      %291 = sbr.rel (%p288) target = $region56
    $region55: #{bottleneck_forward.1} parent=5 // pred_region
      %s292 = ssub.s32 %s15, 1
      %p293 = scmp.lt.s32.totalorder %s20, 1
      %s294 = scalar_select %p293, %s20, 1
      %s295 = smul.addr %s294, 32
      %s296 = smul.addr %s295, 4
      %s297 = scalar_lea.vmem %s0, %s296
      %p298 = pneg %p41
      %p299 = pneg %p38
      %p300 = pneg %p62
      %p301 = pneg %p59
      %p302 = pneg %p83
      %p303 = pneg %p80
      %p304 = pneg %p104
      %p305 = pneg %p101
      %p306 = pneg %p125
      %p307 = pneg %p122
      %p308 = pneg %p146
      %p309 = pneg %p143
      %p310 = pneg %p167
      %p311 = pneg %p164
      %p312 = pneg %p188
      %p313 = pneg %p185
      %p314 = pneg %p209
      %p315 = pneg %p206
      %p316 = pneg %p235
      %p317 = pneg %p232
      %p318 = scmp.lt.s32.totalorder %s20, 1
      %s319 = scalar_select %p318, %s20, 1
      %s320 = smul.addr %s319, 32
      %s321 = smul.addr %s320, 4
      %s322 = scalar_lea.vmem %s9, %s321
      %p323 = scmp.lt.s32.totalorder %s20, 1
      %s324 = scalar_select %p323, %s20, 1
      %s325 = smul.addr %s324, 32
      %s326 = smul.addr %s325, 4
      %s327 = scalar_lea.vmem %s0, %s326
      %p328 = scmp.lt.s32.totalorder %s20, 1
      %s329 = scalar_select %p328, %s20, 1
      %s330 = smul.addr %s329, 32
      %s331 = smul.addr %s330, 4
      %s332 = scalar_lea.vmem %s9, %s331
      %v334 = vld [vmem:[%s327] sm:$0xf]
      %v335 = vld [vmem:[%s327 + $0x4] sm:$0xf]
      %v336 = vld [vmem:[%s327 + $0x8] sm:$0xf]
      %v337 = vld [vmem:[%s327 + $0xc] sm:$0xf]
      %v338 = vld [vmem:[%s327 + $0x10] sm:$0xf]
      %v339 = vld [vmem:[%s327 + $0x14] sm:$0xf]
      %v340 = vld [vmem:[%s327 + $0x18] sm:$0xf]
      %v341 = vld [vmem:[%s327 + $0x1c] sm:$0xf]
      %v342 = vld [vmem:[%s327 + $0x20] sm:$0xf]
      %v343 = vld [vmem:[%s327 + $0x24] sm:$0xf]
      %v344 = vld [vmem:[%s327 + $0x28] sm:$0xf]
      %v345 = vld [vmem:[%s327 + $0x2c] sm:$0xf]
      %v346 = vld [vmem:[%s327 + $0x30] sm:$0xf]
      %v347 = vld [vmem:[%s327 + $0x34] sm:$0xf]
      %v348 = vld [vmem:[%s327 + $0x38] sm:$0xf]
      %v349 = vld [vmem:[%s327 + $0x3c] sm:$0xf]
      %v350 = vld [vmem:[%s327 + $0x40] sm:$0xf]
      %v351 = vld [vmem:[%s327 + $0x44] sm:$0xf]
      %v352 = vld [vmem:[%s327 + $0x48] sm:$0xf]
      %v353 = vld [vmem:[%s327 + $0x4c] sm:$0xf]
      %v354 = vld [vmem:[%s327 + $0x50] sm:$0xf]
      %v355 = vld [vmem:[%s327 + $0x54] sm:$0xf]
      %v356 = vld [vmem:[%s327 + $0x58] sm:$0xf]
      %v357 = vld [vmem:[%s327 + $0x5c] sm:$0xf]
      %v358 = vld [vmem:[%s327 + $0x60] sm:$0xf]
      %v359 = vld [vmem:[%s327 + $0x64] sm:$0xf]
      %v360 = vld [vmem:[%s327 + $0x68] sm:$0xf]
      %v361 = vld [vmem:[%s327 + $0x6c] sm:$0xf]
      %v362 = vld [vmem:[%s327 + $0x70] sm:$0xf]
      %v363 = vld [vmem:[%s327 + $0x74] sm:$0xf]
      %v364 = vld [vmem:[%s327 + $0x78] sm:$0xf]
      %v365 = vld [vmem:[%s327 + $0x7c] sm:$0xf]
      %v366 = vld [vmem:[%s1] sm:$0x3]
      %v367 = vld [vmem:[%s2] sm:$0x1]
      %v369 = vlaneseq
      %v370 = vshrl.u32 %v369, 7
      %v371 = vsub.s32 0, %v370
      %v372 = vrot.slane %v367, %v371
      %v406 = vunpack.c.l.b16 %v334
      %v407 = vunpack.c.l.b16 %v335
      %v408 = vunpack.c.l.b16 %v336
      %v409 = vunpack.c.l.b16 %v337
      %v410 = vunpack.c.l.b16 %v338
      %v411 = vunpack.c.l.b16 %v339
      %v412 = vunpack.c.l.b16 %v340
      %v413 = vunpack.c.l.b16 %v341
      %v414 = vunpack.c.l.b16 %v342
      %v415 = vunpack.c.l.b16 %v343
      %v416 = vunpack.c.l.b16 %v344
      %v417 = vunpack.c.l.b16 %v345
      %v418 = vunpack.c.l.b16 %v346
      %v419 = vunpack.c.l.b16 %v347
      %v420 = vunpack.c.l.b16 %v348
      %v421 = vunpack.c.l.b16 %v349
      %v422 = vunpack.c.l.b16 %v350
      %v423 = vunpack.c.l.b16 %v351
      %v424 = vunpack.c.l.b16 %v352
      %v425 = vunpack.c.l.b16 %v353
      %v426 = vunpack.c.l.b16 %v354
      %v427 = vunpack.c.l.b16 %v355
      %v428 = vunpack.c.l.b16 %v356
      %v429 = vunpack.c.l.b16 %v357
      %v430 = vunpack.c.l.b16 %v358
      %v431 = vunpack.c.l.b16 %v359
      %v432 = vunpack.c.l.b16 %v360
      %v433 = vunpack.c.l.b16 %v361
      %v434 = vunpack.c.l.b16 %v362
      %v435 = vunpack.c.l.b16 %v363
      %v436 = vunpack.c.l.b16 %v364
      %v437 = vunpack.c.l.b16 %v365
      %v438 = vpack.c.b16 %v407, %v406
      %v439 = vpack.c.b16 %v409, %v408
      %v440 = vpack.c.b16 %v411, %v410
      %v441 = vpack.c.b16 %v413, %v412
      %v442 = vpack.c.b16 %v415, %v414
      %v443 = vpack.c.b16 %v417, %v416
      %v444 = vpack.c.b16 %v419, %v418
      %v445 = vpack.c.b16 %v421, %v420
      %v446 = vpack.c.b16 %v423, %v422
      %v447 = vpack.c.b16 %v425, %v424
      %v448 = vpack.c.b16 %v427, %v426
      %v449 = vpack.c.b16 %v429, %v428
      %v450 = vpack.c.b16 %v431, %v430
      %v451 = vpack.c.b16 %v433, %v432
      %v452 = vpack.c.b16 %v435, %v434
      %v453 = vpack.c.b16 %v437, %v436
      %vm454 = vcmask 31744
      %v456 = vsel %vm454, %v438, 0
      %v459 = vsel %vm454, %v439, 0
      %v462 = vsel %vm454, %v440, 0
      %v465 = vsel %vm454, %v441, 0
      %v468 = vsel %vm454, %v442, 0
      %v471 = vsel %vm454, %v443, 0
      %v474 = vsel %vm454, %v444, 0
      %v477 = vsel %vm454, %v445, 0
      %v480 = vsel %vm454, %v446, 0
      %v483 = vsel %vm454, %v447, 0
      %v486 = vsel %vm454, %v448, 0
      %v489 = vsel %vm454, %v449, 0
      %v492 = vsel %vm454, %v450, 0
      %v495 = vsel %vm454, %v451, 0
      %v498 = vsel %vm454, %v452, 0
      %v501 = vsel %vm454, %v453, 0
      %vm503 = vcmask 1041408
      %v505 = vsel %vm503, %v366, 0
      %507 = vmatprep.subr.bf16.mxu0 0
      %508 = vmatpush1.bf16.msra.mxu0 %v505
      %509 = vmatprep.subr.bf16.mxu0 0
      %510 = vmatpush1.bf16.msra.mxu0 0
      %511 = vmatprep.subr.bf16.mxu0 0
      %512 = vmatpush1.bf16.msra.mxu0 0
      %513 = vmatprep.subr.bf16.mxu0 0
      %514 = vmatpush1.bf16.msra.mxu0 0
      %515 = vmatprep.subr.bf16.mxu0 0
      %516 = vmatpush1.bf16.msra.mxu0 0
      %517 = vmatprep.subr.bf16.mxu0 0
      %518 = vmatpush1.bf16.msra.mxu0 0
      %519 = vmatprep.subr.bf16.mxu0 0
      %520 = vmatpush1.bf16.msra.mxu0 0
      %521 = vmatprep.subr.bf16.mxu0 0
      %522 = vmatpush1.bf16.msra.mxu0 0
      %523 = vmatprep.subr.bf16.mxu0 0
      %524 = vmatpush1.bf16.msra.mxu0 0
      %525 = vmatprep.subr.bf16.mxu0 0
      %526 = vmatpush1.bf16.msra.mxu0 0
      %527 = vmatprep.subr.bf16.mxu0 0
      %528 = vmatpush1.bf16.msra.mxu0 0
      %529 = vmatprep.subr.bf16.mxu0 0
      %530 = vmatpush1.bf16.msra.mxu0 0
      %531 = vmatprep.subr.bf16.mxu0 0
      %532 = vmatpush1.bf16.msra.mxu0 0
      %533 = vmatprep.subr.bf16.mxu0 0
      %534 = vmatpush1.bf16.msra.mxu0 0
      %535 = vmatprep.subr.bf16.mxu0 0
      %536 = vmatpush1.bf16.msra.mxu0 0
      %537 = vmatprep.subr.bf16.mxu0 0
      %538 = vmatpush1.bf16.msra.mxu0 0
      %539 = vmatprep.mubr.bf16.mxu0 0
      %540 = vmatmul.mubr.bf16.gmra.mrb[0].mxu0 %v456
      %v541 = vpop.f32.mrb[0].mxu0
      %v542 = vadd.f32 %v372, %v541
      %v543 = vpop.f32.mrb[0].mxu0
      %v544 = vpop.f32.mrb[0].mxu0
      %v545 = vadd.f32 %v372, %v544
      %v546 = vpop.f32.mrb[0].mxu0
      %547 = vmatprep.mubr.bf16.mxu0 0
      %548 = vmatmul.mubr.bf16.gmra.mrb[0].mxu0 %v459
      %v549 = vpop.f32.mrb[0].mxu0
      %v550 = vadd.f32 %v372, %v549
      %v551 = vpop.f32.mrb[0].mxu0
      %v552 = vpop.f32.mrb[0].mxu0
      %v553 = vadd.f32 %v372, %v552
      %v554 = vpop.f32.mrb[0].mxu0
      %555 = vmatprep.mubr.bf16.mxu0 0
      %556 = vmatmul.mubr.bf16.gmra.mrb[0].mxu0 %v462
      %v557 = vpop.f32.mrb[0].mxu0
      %v558 = vadd.f32 %v372, %v557
      %v559 = vpop.f32.mrb[0].mxu0
      %v560 = vpop.f32.mrb[0].mxu0
      %v561 = vadd.f32 %v372, %v560
      %v562 = vpop.f32.mrb[0].mxu0
      %563 = vmatprep.mubr.bf16.mxu0 0
      %564 = vmatmul.mubr.bf16.gmra.mrb[0].mxu0 %v465
      %v565 = vpop.f32.mrb[0].mxu0
      %v566 = vadd.f32 %v372, %v565
      %v567 = vpop.f32.mrb[0].mxu0
      %v568 = vpop.f32.mrb[0].mxu0
      %v569 = vadd.f32 %v372, %v568
      %v570 = vpop.f32.mrb[0].mxu0
      %571 = vmatprep.mubr.bf16.mxu0 0
      %572 = vmatmul.mubr.bf16.gmra.mrb[0].mxu0 %v468
      %v573 = vpop.f32.mrb[0].mxu0
      %v574 = vadd.f32 %v372, %v573
      %v575 = vpop.f32.mrb[0].mxu0
      %v576 = vpop.f32.mrb[0].mxu0
      %v577 = vadd.f32 %v372, %v576
      %v578 = vpop.f32.mrb[0].mxu0
      %579 = vmatprep.mubr.bf16.mxu0 0
      %580 = vmatmul.mubr.bf16.gmra.mrb[0].mxu0 %v471
      %v581 = vpop.f32.mrb[0].mxu0
      %v582 = vadd.f32 %v372, %v581
      %v583 = vpop.f32.mrb[0].mxu0
      %v584 = vpop.f32.mrb[0].mxu0
      %v585 = vadd.f32 %v372, %v584
      %v586 = vpop.f32.mrb[0].mxu0
      %587 = vmatprep.mubr.bf16.mxu0 0
      %588 = vmatmul.mubr.bf16.gmra.mrb[0].mxu0 %v474
      %v589 = vpop.f32.mrb[0].mxu0
      %v590 = vadd.f32 %v372, %v589
      %v591 = vpop.f32.mrb[0].mxu0
      %v592 = vpop.f32.mrb[0].mxu0
      %v593 = vadd.f32 %v372, %v592
      %v594 = vpop.f32.mrb[0].mxu0
      %595 = vmatprep.mubr.bf16.mxu0 0
      %596 = vmatmul.mubr.bf16.gmra.mrb[0].mxu0 %v477
      %v597 = vpop.f32.mrb[0].mxu0
      %v598 = vadd.f32 %v372, %v597
      %v599 = vpop.f32.mrb[0].mxu0
      %v600 = vpop.f32.mrb[0].mxu0
      %v601 = vadd.f32 %v372, %v600
      %v602 = vpop.f32.mrb[0].mxu0
      %603 = vmatprep.mubr.bf16.mxu0 0
      %604 = vmatmul.mubr.bf16.gmra.mrb[0].mxu0 %v480
      %v605 = vpop.f32.mrb[0].mxu0
      %v606 = vadd.f32 %v372, %v605
      %v607 = vpop.f32.mrb[0].mxu0
      %v608 = vpop.f32.mrb[0].mxu0
      %v609 = vadd.f32 %v372, %v608
      %v610 = vpop.f32.mrb[0].mxu0
      %611 = vmatprep.mubr.bf16.mxu0 0
      %612 = vmatmul.mubr.bf16.gmra.mrb[0].mxu0 %v483
      %v613 = vpop.f32.mrb[0].mxu0
      %v614 = vadd.f32 %v372, %v613
      %v615 = vpop.f32.mrb[0].mxu0
      %v616 = vpop.f32.mrb[0].mxu0
      %v617 = vadd.f32 %v372, %v616
      %v618 = vpop.f32.mrb[0].mxu0
      %619 = vmatprep.mubr.bf16.mxu0 0
      %620 = vmatmul.mubr.bf16.gmra.mrb[0].mxu0 %v486
      %v621 = vpop.f32.mrb[0].mxu0
      %v622 = vadd.f32 %v372, %v621
      %v623 = vpop.f32.mrb[0].mxu0
      %v624 = vpop.f32.mrb[0].mxu0
      %v625 = vadd.f32 %v372, %v624
      %v626 = vpop.f32.mrb[0].mxu0
      %627 = vmatprep.mubr.bf16.mxu0 0
      %628 = vmatmul.mubr.bf16.gmra.mrb[0].mxu0 %v489
      %v629 = vpop.f32.mrb[0].mxu0
      %v630 = vadd.f32 %v372, %v629
      %v631 = vpop.f32.mrb[0].mxu0
      %v632 = vpop.f32.mrb[0].mxu0
      %v633 = vadd.f32 %v372, %v632
      %v634 = vpop.f32.mrb[0].mxu0
      %635 = vmatprep.mubr.bf16.mxu0 0
      %636 = vmatmul.mubr.bf16.gmra.mrb[0].mxu0 %v492
      %v637 = vpop.f32.mrb[0].mxu0
      %v638 = vadd.f32 %v372, %v637
      %v639 = vpop.f32.mrb[0].mxu0
      %v640 = vpop.f32.mrb[0].mxu0
      %v641 = vadd.f32 %v372, %v640
      %v642 = vpop.f32.mrb[0].mxu0
      %643 = vmatprep.mubr.bf16.mxu0 0
      %644 = vmatmul.mubr.bf16.gmra.mrb[0].mxu0 %v495
      %v645 = vpop.f32.mrb[0].mxu0
      %v646 = vadd.f32 %v372, %v645
      %v647 = vpop.f32.mrb[0].mxu0
      %v648 = vpop.f32.mrb[0].mxu0
      %v649 = vadd.f32 %v372, %v648
      %v650 = vpop.f32.mrb[0].mxu0
      %651 = vmatprep.mubr.bf16.mxu0 0
      %652 = vmatmul.mubr.bf16.gmra.mrb[0].mxu0 %v498
      %v653 = vpop.f32.mrb[0].mxu0
      %v654 = vadd.f32 %v372, %v653
      %v655 = vpop.f32.mrb[0].mxu0
      %v656 = vpop.f32.mrb[0].mxu0
      %v657 = vadd.f32 %v372, %v656
      %v658 = vpop.f32.mrb[0].mxu0
      %659 = vmatprep.mubr.bf16.mxu0 0
      %660 = vmatmul.mubr.bf16.gmra.mrb[0].mxu0 %v501
      %v661 = vpop.f32.mrb[0].mxu0
      %v662 = vadd.f32 %v372, %v661
      %v663 = vpop.f32.mrb[0].mxu0
      %v664 = vpop.f32.mrb[0].mxu0
      %v665 = vadd.f32 %v372, %v664
      %v666 = vpop.f32.mrb[0].mxu0
      %667 = vdwg.mxu0
      %v668 = vmax.f32 %v542, 0.0
      %v669 = vmax.f32 %v545, 0.0
      %v670 = vmax.f32 %v550, 0.0
      %v671 = vmax.f32 %v553, 0.0
      %v672 = vmax.f32 %v558, 0.0
      %v673 = vmax.f32 %v561, 0.0
      %v674 = vmax.f32 %v566, 0.0
      %v675 = vmax.f32 %v569, 0.0
      %v676 = vmax.f32 %v574, 0.0
      %v677 = vmax.f32 %v577, 0.0
      %v678 = vmax.f32 %v582, 0.0
      %v679 = vmax.f32 %v585, 0.0
      %v680 = vmax.f32 %v590, 0.0
      %v681 = vmax.f32 %v593, 0.0
      %v682 = vmax.f32 %v598, 0.0
      %v683 = vmax.f32 %v601, 0.0
      %v684 = vmax.f32 %v606, 0.0
      %v685 = vmax.f32 %v609, 0.0
      %v686 = vmax.f32 %v614, 0.0
      %v687 = vmax.f32 %v617, 0.0
      %v688 = vmax.f32 %v622, 0.0
      %v689 = vmax.f32 %v625, 0.0
      %v690 = vmax.f32 %v630, 0.0
      %v691 = vmax.f32 %v633, 0.0
      %v692 = vmax.f32 %v638, 0.0
      %v693 = vmax.f32 %v641, 0.0
      %v694 = vmax.f32 %v646, 0.0
      %v695 = vmax.f32 %v649, 0.0
      %v696 = vmax.f32 %v654, 0.0
      %v697 = vmax.f32 %v657, 0.0
      %v698 = vmax.f32 %v662, 0.0
      %v699 = vmax.f32 %v665, 0.0
      %700 = vst.msk [vmem:[#allocation2] sm:$0xff] %vm454, 0.0
      %701 = vst.msk [vmem:[#allocation2 + $0x8] sm:$0xff] %vm454, 0.0
      %vm702 = vcmask 25600
      %703 = vst.msk [vmem:[#allocation2 + $0x10] sm:$0x3] %vm702, 0.0
      %704 = vst.msk [vmem:[#allocation2 + $0x18] sm:$0xff] %vm454, 0.0
      %705 = vst.msk [vmem:[#allocation2 + $0x20] sm:$0xff] %vm454, 0.0
      %706 = vst.msk [vmem:[#allocation2 + $0x28] sm:$0x3] %vm702, 0.0
      %707 = vst.msk [vmem:[#allocation2 + $0x30] sm:$0xff] %vm454, 0.0
      %708 = vst.msk [vmem:[#allocation2 + $0x38] sm:$0xff] %vm454, 0.0
      %709 = vst.msk [vmem:[#allocation2 + $0x40] sm:$0x3] %vm702, 0.0
      %710 = vst.msk [vmem:[#allocation2 + $0x48] sm:$0xff] %vm454, 0.0
      %711 = vst.msk [vmem:[#allocation2 + $0x50] sm:$0xff] %vm454, 0.0
      %712 = vst.msk [vmem:[#allocation2 + $0x58] sm:$0x3] %vm702, 0.0
      %713 = vst.msk [vmem:[#allocation2 + $0x60] sm:$0xff] %vm454, 0.0
      %714 = vst.msk [vmem:[#allocation2 + $0x68] sm:$0xff] %vm454, 0.0
      %715 = vst.msk [vmem:[#allocation2 + $0x70] sm:$0x3] %vm702, 0.0
      %716 = vst.msk [vmem:[#allocation2 + $0x78] sm:$0xff] %vm454, 0.0
      %717 = vst.msk [vmem:[#allocation2 + $0x80] sm:$0xff] %vm454, 0.0
      %718 = vst.msk [vmem:[#allocation2 + $0x88] sm:$0x3] %vm702, 0.0
      %719 = vst.msk [vmem:[#allocation2 + $0x90] sm:$0xff] %vm454, 0.0
      %720 = vst.msk [vmem:[#allocation2 + $0x98] sm:$0xff] %vm454, 0.0
      %721 = vst.msk [vmem:[#allocation2 + $0xa0] sm:$0x3] %vm702, 0.0
      %722 = vst.msk [vmem:[#allocation2 + $0xa8] sm:$0xff] %vm454, 0.0
      %723 = vst.msk [vmem:[#allocation2 + $0xb0] sm:$0xff] %vm454, 0.0
      %724 = vst.msk [vmem:[#allocation2 + $0xb8] sm:$0x3] %vm702, 0.0
      %725 = vst.msk [vmem:[#allocation2 + $0xc0] sm:$0xff] %vm454, 0.0
      %726 = vst.msk [vmem:[#allocation2 + $0xc8] sm:$0xff] %vm454, 0.0
      %727 = vst.msk [vmem:[#allocation2 + $0xd0] sm:$0x3] %vm702, 0.0
      %728 = vst.msk [vmem:[#allocation2 + $0xd8] sm:$0xff] %vm454, 0.0
      %729 = vst.msk [vmem:[#allocation2 + $0xe0] sm:$0xff] %vm454, 0.0
      %730 = vst.msk [vmem:[#allocation2 + $0xe8] sm:$0x3] %vm702, 0.0
      %731 = vst.msk [vmem:[#allocation2 + $0xf0] sm:$0xff] %vm454, 0.0
      %732 = vst.msk [vmem:[#allocation2 + $0xf8] sm:$0xff] %vm454, 0.0
      %733 = vst.msk [vmem:[#allocation2 + $0x100] sm:$0x3] %vm702, 0.0
      %734 = vst.msk [vmem:[#allocation2 + $0x108] sm:$0xff] %vm454, 0.0
      %735 = vst.msk [vmem:[#allocation2 + $0x110] sm:$0xff] %vm454, 0.0
      %736 = vst.msk [vmem:[#allocation2 + $0x118] sm:$0x3] %vm702, 0.0
      %737 = vst.msk [vmem:[#allocation2 + $0x120] sm:$0xff] %vm454, 0.0
      %738 = vst.msk [vmem:[#allocation2 + $0x128] sm:$0xff] %vm454, 0.0
      %739 = vst.msk [vmem:[#allocation2 + $0x130] sm:$0x3] %vm702, 0.0
      %740 = vst.msk [vmem:[#allocation2 + $0x138] sm:$0xff] %vm454, 0.0
      %741 = vst.msk [vmem:[#allocation2 + $0x140] sm:$0xff] %vm454, 0.0
      %742 = vst.msk [vmem:[#allocation2 + $0x148] sm:$0x3] %vm702, 0.0
      %743 = vst.msk [vmem:[#allocation2 + $0x150] sm:$0xff] %vm454, 0.0
      %744 = vst.msk [vmem:[#allocation2 + $0x158] sm:$0xff] %vm454, 0.0
      %745 = vst.msk [vmem:[#allocation2 + $0x160] sm:$0x3] %vm702, 0.0
      %746 = vst.msk [vmem:[#allocation2 + $0x168] sm:$0xff] %vm454, 0.0
      %747 = vst.msk [vmem:[#allocation2 + $0x170] sm:$0xff] %vm454, 0.0
      %748 = vst.msk [vmem:[#allocation2 + $0x178] sm:$0x3] %vm702, 0.0
      %749 = vst.msk [vmem:[#allocation2 + $0x180] sm:$0xff] %vm454, 0.0
      %750 = vst.msk [vmem:[#allocation2 + $0x188] sm:$0xff] %vm454, 0.0
      %751 = vst.msk [vmem:[#allocation2 + $0x190] sm:$0x3] %vm702, 0.0
      %752 = vst.msk [vmem:[#allocation2 + $0x198] sm:$0xff] %vm454, 0.0
      %753 = vst.msk [vmem:[#allocation2 + $0x1a0] sm:$0xff] %vm454, 0.0
      %754 = vst.msk [vmem:[#allocation2 + $0x1a8] sm:$0x3] %vm702, 0.0
      %s755 = scalar_lea.vmem [#allocation2], 24
      %756 = vst.msk [vmem:[%s755 + $0x1] sm:$0xff] %vm454, %v668
      %757 = vst.msk [vmem:[%s755 + $0x9] sm:$0xff] %vm454, %v669
      %758 = vst.msk [vmem:[%s755 + $0x19] sm:$0xff] %vm454, %v670
      %759 = vst.msk [vmem:[%s755 + $0x21] sm:$0xff] %vm454, %v671
      %760 = vst.msk [vmem:[%s755 + $0x31] sm:$0xff] %vm454, %v672
      %761 = vst.msk [vmem:[%s755 + $0x39] sm:$0xff] %vm454, %v673
      %762 = vst.msk [vmem:[%s755 + $0x49] sm:$0xff] %vm454, %v674
      %763 = vst.msk [vmem:[%s755 + $0x51] sm:$0xff] %vm454, %v675
      %764 = vst.msk [vmem:[%s755 + $0x61] sm:$0xff] %vm454, %v676
      %765 = vst.msk [vmem:[%s755 + $0x69] sm:$0xff] %vm454, %v677
      %766 = vst.msk [vmem:[%s755 + $0x79] sm:$0xff] %vm454, %v678
      %767 = vst.msk [vmem:[%s755 + $0x81] sm:$0xff] %vm454, %v679
      %768 = vst.msk [vmem:[%s755 + $0x91] sm:$0xff] %vm454, %v680
      %769 = vst.msk [vmem:[%s755 + $0x99] sm:$0xff] %vm454, %v681
      %770 = vst.msk [vmem:[%s755 + $0xa9] sm:$0xff] %vm454, %v682
      %771 = vst.msk [vmem:[%s755 + $0xb1] sm:$0xff] %vm454, %v683
      %772 = vst.msk [vmem:[%s755 + $0xc1] sm:$0xff] %vm454, %v684
      %773 = vst.msk [vmem:[%s755 + $0xc9] sm:$0xff] %vm454, %v685
      %774 = vst.msk [vmem:[%s755 + $0xd9] sm:$0xff] %vm454, %v686
      %775 = vst.msk [vmem:[%s755 + $0xe1] sm:$0xff] %vm454, %v687
      %776 = vst.msk [vmem:[%s755 + $0xf1] sm:$0xff] %vm454, %v688
      %777 = vst.msk [vmem:[%s755 + $0xf9] sm:$0xff] %vm454, %v689
      %778 = vst.msk [vmem:[%s755 + $0x109] sm:$0xff] %vm454, %v690
      %779 = vst.msk [vmem:[%s755 + $0x111] sm:$0xff] %vm454, %v691
      %780 = vst.msk [vmem:[%s755 + $0x121] sm:$0xff] %vm454, %v692
      %781 = vst.msk [vmem:[%s755 + $0x129] sm:$0xff] %vm454, %v693
      %782 = vst.msk [vmem:[%s755 + $0x139] sm:$0xff] %vm454, %v694
      %783 = vst.msk [vmem:[%s755 + $0x141] sm:$0xff] %vm454, %v695
      %784 = vst.msk [vmem:[%s755 + $0x151] sm:$0xff] %vm454, %v696
      %785 = vst.msk [vmem:[%s755 + $0x159] sm:$0xff] %vm454, %v697
      %786 = vst.msk [vmem:[%s755 + $0x169] sm:$0xff] %vm454, %v698
      %787 = vst.msk [vmem:[%s755 + $0x171] sm:$0xff] %vm454, %v699
      %v788 = vld [vmem:[#allocation2] sm:$0xff]
      %v789 = vld [vmem:[#allocation2 + $0x8] sm:$0xff]
      %v790 = vld [vmem:[#allocation2 + $0x18] sm:$0xff]
      %v791 = vld [vmem:[#allocation2 + $0x20] sm:$0xff]
      %v792 = vld [vmem:[#allocation2 + $0x30] sm:$0xff]
      %v793 = vld [vmem:[#allocation2 + $0x38] sm:$0xff]
      %v794 = vld [vmem:[#allocation2 + $0x48] sm:$0xff]
      %v795 = vld [vmem:[#allocation2 + $0x50] sm:$0xff]
      %v796 = vld [vmem:[#allocation2 + $0x60] sm:$0xff]
      %v797 = vld [vmem:[#allocation2 + $0x68] sm:$0xff]
      %v798 = vld [vmem:[#allocation2 + $0x78] sm:$0xff]
      %v799 = vld [vmem:[#allocation2 + $0x80] sm:$0xff]
      %v800 = vld [vmem:[#allocation2 + $0x90] sm:$0xff]
      %v801 = vld [vmem:[#allocation2 + $0x98] sm:$0xff]
      %v802 = vld [vmem:[#allocation2 + $0xa8] sm:$0xff]
      %v803 = vld [vmem:[#allocation2 + $0xb0] sm:$0xff]
      %v804 = vld [vmem:[#allocation2 + $0xc0] sm:$0xff]
      %v805 = vld [vmem:[#allocation2 + $0xc8] sm:$0xff]
      %v806 = vld [vmem:[#allocation2 + $0xd8] sm:$0xff]
      %v807 = vld [vmem:[#allocation2 + $0xe0] sm:$0xff]
      %v808 = vld [vmem:[#allocation2 + $0xf0] sm:$0xff]
      %v809 = vld [vmem:[#allocation2 + $0xf8] sm:$0xff]
      %v810 = vld [vmem:[#allocation2 + $0x108] sm:$0xff]
      %v811 = vld [vmem:[#allocation2 + $0x110] sm:$0xff]
      %v812 = vld [vmem:[#allocation2 + $0x120] sm:$0xff]
      %v813 = vld [vmem:[#allocation2 + $0x128] sm:$0xff]
      %v814 = vld [vmem:[#allocation2 + $0x138] sm:$0xff]
      %v815 = vld [vmem:[#allocation2 + $0x140] sm:$0xff]
      %v816 = vld [vmem:[#allocation2 + $0x150] sm:$0xff]
      %v817 = vld [vmem:[#allocation2 + $0x158] sm:$0xff]
      %v818 = vld [vmem:[#allocation2 + $0x168] sm:$0xff]
      %v819 = vld [vmem:[#allocation2 + $0x170] sm:$0xff]
      %v820 = vpack.c.bf16 %v789, %v788
      %v821 = vpack.c.bf16 %v791, %v790
      %v822 = vpack.c.bf16 %v793, %v792
      %v823 = vpack.c.bf16 %v795, %v794
      %v824 = vpack.c.bf16 %v797, %v796
      %v825 = vpack.c.bf16 %v799, %v798
      %v826 = vpack.c.bf16 %v801, %v800
      %v827 = vpack.c.bf16 %v803, %v802
      %v828 = vpack.c.bf16 %v805, %v804
      %v829 = vpack.c.bf16 %v807, %v806
      %v830 = vpack.c.bf16 %v809, %v808
      %v831 = vpack.c.bf16 %v811, %v810
      %v832 = vpack.c.bf16 %v813, %v812
      %v833 = vpack.c.bf16 %v815, %v814
      %v834 = vpack.c.bf16 %v817, %v816
      %v835 = vpack.c.bf16 %v819, %v818
      %836 = vst.msk [vmem:[#allocation3] sm:$0xff] %vm454, %v820
      %837 = vst.msk [vmem:[#allocation3 + $0x8] sm:$0xff] %vm454, %v821
      %838 = vst.msk [vmem:[#allocation3 + $0x10] sm:$0xff] %vm454, %v822
      %839 = vst.msk [vmem:[#allocation3 + $0x18] sm:$0xff] %vm454, %v823
      %840 = vst.msk [vmem:[#allocation3 + $0x20] sm:$0xff] %vm454, %v824
      %841 = vst.msk [vmem:[#allocation3 + $0x28] sm:$0xff] %vm454, %v825
      %842 = vst.msk [vmem:[#allocation3 + $0x30] sm:$0xff] %vm454, %v826
      %843 = vst.msk [vmem:[#allocation3 + $0x38] sm:$0xff] %vm454, %v827
      %844 = vst.msk [vmem:[#allocation3 + $0x40] sm:$0xff] %vm454, %v828
      %845 = vst.msk [vmem:[#allocation3 + $0x48] sm:$0xff] %vm454, %v829
      %846 = vst.msk [vmem:[#allocation3 + $0x50] sm:$0xff] %vm454, %v830
      %847 = vst.msk [vmem:[#allocation3 + $0x58] sm:$0xff] %vm454, %v831
      %848 = vst.msk [vmem:[#allocation3 + $0x60] sm:$0xff] %vm454, %v832
      %849 = vst.msk [vmem:[#allocation3 + $0x68] sm:$0xff] %vm454, %v833
      %850 = vst.msk [vmem:[#allocation3 + $0x70] sm:$0xff] %vm454, %v834
      %851 = vst.msk [vmem:[#allocation3 + $0x78] sm:$0xff] %vm454, %v835
      %v852 = vld [vmem:[#allocation2 + $0x1] sm:$0xff]
      %v853 = vld [vmem:[#allocation2 + $0x9] sm:$0xff]
      %v854 = vld [vmem:[#allocation2 + $0x19] sm:$0xff]
      %v855 = vld [vmem:[#allocation2 + $0x21] sm:$0xff]
      %v856 = vld [vmem:[#allocation2 + $0x31] sm:$0xff]
      %v857 = vld [vmem:[#allocation2 + $0x39] sm:$0xff]
      %v858 = vld [vmem:[#allocation2 + $0x49] sm:$0xff]
      %v859 = vld [vmem:[#allocation2 + $0x51] sm:$0xff]
      %v860 = vld [vmem:[#allocation2 + $0x61] sm:$0xff]
      %v861 = vld [vmem:[#allocation2 + $0x69] sm:$0xff]
      %v862 = vld [vmem:[#allocation2 + $0x79] sm:$0xff]
      %v863 = vld [vmem:[#allocation2 + $0x81] sm:$0xff]
      %v864 = vld [vmem:[#allocation2 + $0x91] sm:$0xff]
      %v865 = vld [vmem:[#allocation2 + $0x99] sm:$0xff]
      %v866 = vld [vmem:[#allocation2 + $0xa9] sm:$0xff]
      %v867 = vld [vmem:[#allocation2 + $0xb1] sm:$0xff]
      %v868 = vld [vmem:[#allocation2 + $0xc1] sm:$0xff]
      %v869 = vld [vmem:[#allocation2 + $0xc9] sm:$0xff]
      %v870 = vld [vmem:[#allocation2 + $0xd9] sm:$0xff]
      %v871 = vld [vmem:[#allocation2 + $0xe1] sm:$0xff]
      %v872 = vld [vmem:[#allocation2 + $0xf1] sm:$0xff]
      %v873 = vld [vmem:[#allocation2 + $0xf9] sm:$0xff]
      %v874 = vld [vmem:[#allocation2 + $0x109] sm:$0xff]
      %v875 = vld [vmem:[#allocation2 + $0x111] sm:$0xff]
      %v876 = vld [vmem:[#allocation2 + $0x121] sm:$0xff]
      %v877 = vld [vmem:[#allocation2 + $0x129] sm:$0xff]
      %v878 = vld [vmem:[#allocation2 + $0x139] sm:$0xff]
      %v879 = vld [vmem:[#allocation2 + $0x141] sm:$0xff]
      %v880 = vld [vmem:[#allocation2 + $0x151] sm:$0xff]
      %v881 = vld [vmem:[#allocation2 + $0x159] sm:$0xff]
      %v882 = vld [vmem:[#allocation2 + $0x169] sm:$0xff]
      %v883 = vld [vmem:[#allocation2 + $0x171] sm:$0xff]
      %v884 = vpack.c.bf16 %v853, %v852
      %v885 = vpack.c.bf16 %v855, %v854
      %v886 = vpack.c.bf16 %v857, %v856
      %v887 = vpack.c.bf16 %v859, %v858
      %v888 = vpack.c.bf16 %v861, %v860
      %v889 = vpack.c.bf16 %v863, %v862
      %v890 = vpack.c.bf16 %v865, %v864
      %v891 = vpack.c.bf16 %v867, %v866
      %v892 = vpack.c.bf16 %v869, %v868
      %v893 = vpack.c.bf16 %v871, %v870
      %v894 = vpack.c.bf16 %v873, %v872
      %v895 = vpack.c.bf16 %v875, %v874
      %v896 = vpack.c.bf16 %v877, %v876
      %v897 = vpack.c.bf16 %v879, %v878
      %v898 = vpack.c.bf16 %v881, %v880
      %v899 = vpack.c.bf16 %v883, %v882
      %916 = vrot.lane.b32.xlu0 %v884, 4
      %v917 = vpop.permute.xlu0 %916
      %918 = vrot.lane.b32.xlu0 %v885, 4
      %v919 = vpop.permute.xlu0 %918
      %920 = vrot.lane.b32.xlu0 %v886, 4
      %v921 = vpop.permute.xlu0 %920
      %922 = vrot.lane.b32.xlu0 %v887, 4
      %v923 = vpop.permute.xlu0 %922
      %924 = vrot.lane.b32.xlu0 %v888, 4
      %v925 = vpop.permute.xlu0 %924
      %926 = vrot.lane.b32.xlu0 %v889, 4
      %v927 = vpop.permute.xlu0 %926
      %928 = vrot.lane.b32.xlu0 %v890, 4
      %v929 = vpop.permute.xlu0 %928
      %930 = vrot.lane.b32.xlu0 %v891, 4
      %v931 = vpop.permute.xlu0 %930
      %932 = vrot.lane.b32.xlu0 %v892, 4
      %v933 = vpop.permute.xlu0 %932
      %934 = vrot.lane.b32.xlu0 %v893, 4
      %v935 = vpop.permute.xlu0 %934
      %936 = vrot.lane.b32.xlu0 %v894, 4
      %v937 = vpop.permute.xlu0 %936
      %938 = vrot.lane.b32.xlu0 %v895, 4
      %v939 = vpop.permute.xlu0 %938
      %940 = vrot.lane.b32.xlu0 %v896, 4
      %v941 = vpop.permute.xlu0 %940
      %942 = vrot.lane.b32.xlu0 %v897, 4
      %v943 = vpop.permute.xlu0 %942
      %944 = vrot.lane.b32.xlu0 %v898, 4
      %v945 = vpop.permute.xlu0 %944
      %946 = vrot.lane.b32.xlu0 %v899, 4
      %v947 = vpop.permute.xlu0 %946
      %vm964 = vcmask 64544
      %965 = vst.msk [vmem:[#allocation3] sm:$0xff] %vm964, %v917
      %966 = vst.msk [vmem:[#allocation3 + $0x8] sm:$0xff] %vm964, %v919
      %967 = vst.msk [vmem:[#allocation3 + $0x10] sm:$0xff] %vm964, %v921
      %968 = vst.msk [vmem:[#allocation3 + $0x18] sm:$0xff] %vm964, %v923
      %969 = vst.msk [vmem:[#allocation3 + $0x20] sm:$0xff] %vm964, %v925
      %970 = vst.msk [vmem:[#allocation3 + $0x28] sm:$0xff] %vm964, %v927
      %971 = vst.msk [vmem:[#allocation3 + $0x30] sm:$0xff] %vm964, %v929
      %972 = vst.msk [vmem:[#allocation3 + $0x38] sm:$0xff] %vm964, %v931
      %973 = vst.msk [vmem:[#allocation3 + $0x40] sm:$0xff] %vm964, %v933
      %974 = vst.msk [vmem:[#allocation3 + $0x48] sm:$0xff] %vm964, %v935
      %975 = vst.msk [vmem:[#allocation3 + $0x50] sm:$0xff] %vm964, %v937
      %976 = vst.msk [vmem:[#allocation3 + $0x58] sm:$0xff] %vm964, %v939
      %977 = vst.msk [vmem:[#allocation3 + $0x60] sm:$0xff] %vm964, %v941
      %978 = vst.msk [vmem:[#allocation3 + $0x68] sm:$0xff] %vm964, %v943
      %979 = vst.msk [vmem:[#allocation3 + $0x70] sm:$0xff] %vm964, %v945
      %980 = vst.msk [vmem:[#allocation3 + $0x78] sm:$0xff] %vm964, %v947
      %v981 = vld [vmem:[#allocation2 + $0x2] sm:$0xff]
      %v982 = vld [vmem:[#allocation2 + $0xa] sm:$0xff]
      %v983 = vld [vmem:[#allocation2 + $0x1a] sm:$0xff]
      %v984 = vld [vmem:[#allocation2 + $0x22] sm:$0xff]
      %v985 = vld [vmem:[#allocation2 + $0x32] sm:$0xff]
      %v986 = vld [vmem:[#allocation2 + $0x3a] sm:$0xff]
      %v987 = vld [vmem:[#allocation2 + $0x4a] sm:$0xff]
      %v988 = vld [vmem:[#allocation2 + $0x52] sm:$0xff]
      %v989 = vld [vmem:[#allocation2 + $0x62] sm:$0xff]
      %v990 = vld [vmem:[#allocation2 + $0x6a] sm:$0xff]
      %v991 = vld [vmem:[#allocation2 + $0x7a] sm:$0xff]
      %v992 = vld [vmem:[#allocation2 + $0x82] sm:$0xff]
      %v993 = vld [vmem:[#allocation2 + $0x92] sm:$0xff]
      %v994 = vld [vmem:[#allocation2 + $0x9a] sm:$0xff]
      %v995 = vld [vmem:[#allocation2 + $0xaa] sm:$0xff]
      %v996 = vld [vmem:[#allocation2 + $0xb2] sm:$0xff]
      %v997 = vld [vmem:[#allocation2 + $0xc2] sm:$0xff]
      %v998 = vld [vmem:[#allocation2 + $0xca] sm:$0xff]
      %v999 = vld [vmem:[#allocation2 + $0xda] sm:$0xff]
      %v1000 = vld [vmem:[#allocation2 + $0xe2] sm:$0xff]
      %v1001 = vld [vmem:[#allocation2 + $0xf2] sm:$0xff]
      %v1002 = vld [vmem:[#allocation2 + $0xfa] sm:$0xff]
      %v1003 = vld [vmem:[#allocation2 + $0x10a] sm:$0xff]
      %v1004 = vld [vmem:[#allocation2 + $0x112] sm:$0xff]
      %v1005 = vld [vmem:[#allocation2 + $0x122] sm:$0xff]
      %v1006 = vld [vmem:[#allocation2 + $0x12a] sm:$0xff]
      %v1007 = vld [vmem:[#allocation2 + $0x13a] sm:$0xff]
      %v1008 = vld [vmem:[#allocation2 + $0x142] sm:$0xff]
      %v1009 = vld [vmem:[#allocation2 + $0x152] sm:$0xff]
      %v1010 = vld [vmem:[#allocation2 + $0x15a] sm:$0xff]
      %v1011 = vld [vmem:[#allocation2 + $0x16a] sm:$0xff]
      %v1012 = vld [vmem:[#allocation2 + $0x172] sm:$0xff]
      %v1013 = vpack.c.bf16 %v982, %v981
      %v1014 = vpack.c.bf16 %v984, %v983
      %v1015 = vpack.c.bf16 %v986, %v985
      %v1016 = vpack.c.bf16 %v988, %v987
      %v1017 = vpack.c.bf16 %v990, %v989
      %v1018 = vpack.c.bf16 %v992, %v991
      %v1019 = vpack.c.bf16 %v994, %v993
      %v1020 = vpack.c.bf16 %v996, %v995
      %v1021 = vpack.c.bf16 %v998, %v997
      %v1022 = vpack.c.bf16 %v1000, %v999
      %v1023 = vpack.c.bf16 %v1002, %v1001
      %v1024 = vpack.c.bf16 %v1004, %v1003
      %v1025 = vpack.c.bf16 %v1006, %v1005
      %v1026 = vpack.c.bf16 %v1008, %v1007
      %v1027 = vpack.c.bf16 %v1010, %v1009
      %v1028 = vpack.c.bf16 %v1012, %v1011
      %1045 = vrot.lane.b32.xlu0 %v1013, 8
      %v1046 = vpop.permute.xlu0 %1045
      %1047 = vrot.lane.b32.xlu0 %v1014, 8
      %v1048 = vpop.permute.xlu0 %1047
      %1049 = vrot.lane.b32.xlu0 %v1015, 8
      %v1050 = vpop.permute.xlu0 %1049
      %1051 = vrot.lane.b32.xlu0 %v1016, 8
      %v1052 = vpop.permute.xlu0 %1051
      %1053 = vrot.lane.b32.xlu0 %v1017, 8
      %v1054 = vpop.permute.xlu0 %1053
      %1055 = vrot.lane.b32.xlu0 %v1018, 8
      %v1056 = vpop.permute.xlu0 %1055
      %1057 = vrot.lane.b32.xlu0 %v1019, 8
      %v1058 = vpop.permute.xlu0 %1057
      %1059 = vrot.lane.b32.xlu0 %v1020, 8
      %v1060 = vpop.permute.xlu0 %1059
      %1061 = vrot.lane.b32.xlu0 %v1021, 8
      %v1062 = vpop.permute.xlu0 %1061
      %1063 = vrot.lane.b32.xlu0 %v1022, 8
      %v1064 = vpop.permute.xlu0 %1063
      %1065 = vrot.lane.b32.xlu0 %v1023, 8
      %v1066 = vpop.permute.xlu0 %1065
      %1067 = vrot.lane.b32.xlu0 %v1024, 8
      %v1068 = vpop.permute.xlu0 %1067
      %1069 = vrot.lane.b32.xlu0 %v1025, 8
      %v1070 = vpop.permute.xlu0 %1069
      %1071 = vrot.lane.b32.xlu0 %v1026, 8
      %v1072 = vpop.permute.xlu0 %1071
      %1073 = vrot.lane.b32.xlu0 %v1027, 8
      %v1074 = vpop.permute.xlu0 %1073
      %1075 = vrot.lane.b32.xlu0 %v1028, 8
      %v1076 = vpop.permute.xlu0 %1075
      %vm1093 = vcmask 97344
      %1094 = vst.msk [vmem:[#allocation3] sm:$0xff] %vm1093, %v1046
      %1095 = vst.msk [vmem:[#allocation3 + $0x8] sm:$0xff] %vm1093, %v1048
      %1096 = vst.msk [vmem:[#allocation3 + $0x10] sm:$0xff] %vm1093, %v1050
      %1097 = vst.msk [vmem:[#allocation3 + $0x18] sm:$0xff] %vm1093, %v1052
      %1098 = vst.msk [vmem:[#allocation3 + $0x20] sm:$0xff] %vm1093, %v1054
      %1099 = vst.msk [vmem:[#allocation3 + $0x28] sm:$0xff] %vm1093, %v1056
      %1100 = vst.msk [vmem:[#allocation3 + $0x30] sm:$0xff] %vm1093, %v1058
      %1101 = vst.msk [vmem:[#allocation3 + $0x38] sm:$0xff] %vm1093, %v1060
      %1102 = vst.msk [vmem:[#allocation3 + $0x40] sm:$0xff] %vm1093, %v1062
      %1103 = vst.msk [vmem:[#allocation3 + $0x48] sm:$0xff] %vm1093, %v1064
      %1104 = vst.msk [vmem:[#allocation3 + $0x50] sm:$0xff] %vm1093, %v1066
      %1105 = vst.msk [vmem:[#allocation3 + $0x58] sm:$0xff] %vm1093, %v1068
      %1106 = vst.msk [vmem:[#allocation3 + $0x60] sm:$0xff] %vm1093, %v1070
      %1107 = vst.msk [vmem:[#allocation3 + $0x68] sm:$0xff] %vm1093, %v1072
      %1108 = vst.msk [vmem:[#allocation3 + $0x70] sm:$0xff] %vm1093, %v1074
      %1109 = vst.msk [vmem:[#allocation3 + $0x78] sm:$0xff] %vm1093, %v1076
      %v1110 = vld [vmem:[%s755] sm:$0xff]
      %v1111 = vld [vmem:[%s755 + $0x8] sm:$0xff]
      %v1112 = vld [vmem:[%s755 + $0x18] sm:$0xff]
      %v1113 = vld [vmem:[%s755 + $0x20] sm:$0xff]
      %v1114 = vld [vmem:[%s755 + $0x30] sm:$0xff]
      %v1115 = vld [vmem:[%s755 + $0x38] sm:$0xff]
      %v1116 = vld [vmem:[%s755 + $0x48] sm:$0xff]
      %v1117 = vld [vmem:[%s755 + $0x50] sm:$0xff]
      %v1118 = vld [vmem:[%s755 + $0x60] sm:$0xff]
      %v1119 = vld [vmem:[%s755 + $0x68] sm:$0xff]
      %v1120 = vld [vmem:[%s755 + $0x78] sm:$0xff]
      %v1121 = vld [vmem:[%s755 + $0x80] sm:$0xff]
      %v1122 = vld [vmem:[%s755 + $0x90] sm:$0xff]
      %v1123 = vld [vmem:[%s755 + $0x98] sm:$0xff]
      %v1124 = vld [vmem:[%s755 + $0xa8] sm:$0xff]
      %v1125 = vld [vmem:[%s755 + $0xb0] sm:$0xff]
      %v1126 = vld [vmem:[%s755 + $0xc0] sm:$0xff]
      %v1127 = vld [vmem:[%s755 + $0xc8] sm:$0xff]
      %v1128 = vld [vmem:[%s755 + $0xd8] sm:$0xff]
      %v1129 = vld [vmem:[%s755 + $0xe0] sm:$0xff]
      %v1130 = vld [vmem:[%s755 + $0xf0] sm:$0xff]
      %v1131 = vld [vmem:[%s755 + $0xf8] sm:$0xff]
      %v1132 = vld [vmem:[%s755 + $0x108] sm:$0xff]
      %v1133 = vld [vmem:[%s755 + $0x110] sm:$0xff]
      %v1134 = vld [vmem:[%s755 + $0x120] sm:$0xff]
      %v1135 = vld [vmem:[%s755 + $0x128] sm:$0xff]
      %v1136 = vld [vmem:[%s755 + $0x138] sm:$0xff]
      %v1137 = vld [vmem:[%s755 + $0x140] sm:$0xff]
      %v1138 = vld [vmem:[%s755 + $0x150] sm:$0xff]
      %v1139 = vld [vmem:[%s755 + $0x158] sm:$0xff]
      %v1140 = vld [vmem:[%s755 + $0x168] sm:$0xff]
      %v1141 = vld [vmem:[%s755 + $0x170] sm:$0xff]
      %v1142 = vpack.c.bf16 %v1111, %v1110
      %v1143 = vpack.c.bf16 %v1113, %v1112
      %v1144 = vpack.c.bf16 %v1115, %v1114
      %v1145 = vpack.c.bf16 %v1117, %v1116
      %v1146 = vpack.c.bf16 %v1119, %v1118
      %v1147 = vpack.c.bf16 %v1121, %v1120
      %v1148 = vpack.c.bf16 %v1123, %v1122
      %v1149 = vpack.c.bf16 %v1125, %v1124
      %v1150 = vpack.c.bf16 %v1127, %v1126
      %v1151 = vpack.c.bf16 %v1129, %v1128
      %v1152 = vpack.c.bf16 %v1131, %v1130
      %v1153 = vpack.c.bf16 %v1133, %v1132
      %v1154 = vpack.c.bf16 %v1135, %v1134
      %v1155 = vpack.c.bf16 %v1137, %v1136
      %v1156 = vpack.c.bf16 %v1139, %v1138
      %v1157 = vpack.c.bf16 %v1141, %v1140
      %1174 = vrot.lane.b32.xlu0 %v1142, 12
      %v1175 = vpop.permute.xlu0 %1174
      %1176 = vrot.lane.b32.xlu0 %v1143, 12
      %v1177 = vpop.permute.xlu0 %1176
      %1178 = vrot.lane.b32.xlu0 %v1144, 12
      %v1179 = vpop.permute.xlu0 %1178
      %1180 = vrot.lane.b32.xlu0 %v1145, 12
      %v1181 = vpop.permute.xlu0 %1180
      %1182 = vrot.lane.b32.xlu0 %v1146, 12
      %v1183 = vpop.permute.xlu0 %1182
      %1184 = vrot.lane.b32.xlu0 %v1147, 12
      %v1185 = vpop.permute.xlu0 %1184
      %1186 = vrot.lane.b32.xlu0 %v1148, 12
      %v1187 = vpop.permute.xlu0 %1186
      %1188 = vrot.lane.b32.xlu0 %v1149, 12
      %v1189 = vpop.permute.xlu0 %1188
      %1190 = vrot.lane.b32.xlu0 %v1150, 12
      %v1191 = vpop.permute.xlu0 %1190
      %1192 = vrot.lane.b32.xlu0 %v1151, 12
      %v1193 = vpop.permute.xlu0 %1192
      %1194 = vrot.lane.b32.xlu0 %v1152, 12
      %v1195 = vpop.permute.xlu0 %1194
      %1196 = vrot.lane.b32.xlu0 %v1153, 12
      %v1197 = vpop.permute.xlu0 %1196
      %1198 = vrot.lane.b32.xlu0 %v1154, 12
      %v1199 = vpop.permute.xlu0 %1198
      %1200 = vrot.lane.b32.xlu0 %v1155, 12
      %v1201 = vpop.permute.xlu0 %1200
      %1202 = vrot.lane.b32.xlu0 %v1156, 12
      %v1203 = vpop.permute.xlu0 %1202
      %1204 = vrot.lane.b32.xlu0 %v1157, 12
      %v1205 = vpop.permute.xlu0 %1204
      %vm1222 = vcmask 130144
      %1223 = vst.msk [vmem:[#allocation3] sm:$0xff] %vm1222, %v1175
      %1224 = vst.msk [vmem:[#allocation3 + $0x8] sm:$0xff] %vm1222, %v1177
      %1225 = vst.msk [vmem:[#allocation3 + $0x10] sm:$0xff] %vm1222, %v1179
      %1226 = vst.msk [vmem:[#allocation3 + $0x18] sm:$0xff] %vm1222, %v1181
      %1227 = vst.msk [vmem:[#allocation3 + $0x20] sm:$0xff] %vm1222, %v1183
      %1228 = vst.msk [vmem:[#allocation3 + $0x28] sm:$0xff] %vm1222, %v1185
      %1229 = vst.msk [vmem:[#allocation3 + $0x30] sm:$0xff] %vm1222, %v1187
      %1230 = vst.msk [vmem:[#allocation3 + $0x38] sm:$0xff] %vm1222, %v1189
      %1231 = vst.msk [vmem:[#allocation3 + $0x40] sm:$0xff] %vm1222, %v1191
      %1232 = vst.msk [vmem:[#allocation3 + $0x48] sm:$0xff] %vm1222, %v1193
      %1233 = vst.msk [vmem:[#allocation3 + $0x50] sm:$0xff] %vm1222, %v1195
      %1234 = vst.msk [vmem:[#allocation3 + $0x58] sm:$0xff] %vm1222, %v1197
      %1235 = vst.msk [vmem:[#allocation3 + $0x60] sm:$0xff] %vm1222, %v1199
      %1236 = vst.msk [vmem:[#allocation3 + $0x68] sm:$0xff] %vm1222, %v1201
      %1237 = vst.msk [vmem:[#allocation3 + $0x70] sm:$0xff] %vm1222, %v1203
      %1238 = vst.msk [vmem:[#allocation3 + $0x78] sm:$0xff] %vm1222, %v1205
      %v1239 = vld [vmem:[%s755 + $0x1] sm:$0xff]
      %v1240 = vld [vmem:[%s755 + $0x9] sm:$0xff]
      %v1241 = vld [vmem:[%s755 + $0x19] sm:$0xff]
      %v1242 = vld [vmem:[%s755 + $0x21] sm:$0xff]
      %v1243 = vld [vmem:[%s755 + $0x31] sm:$0xff]
      %v1244 = vld [vmem:[%s755 + $0x39] sm:$0xff]
      %v1245 = vld [vmem:[%s755 + $0x49] sm:$0xff]
      %v1246 = vld [vmem:[%s755 + $0x51] sm:$0xff]
      %v1247 = vld [vmem:[%s755 + $0x61] sm:$0xff]
      %v1248 = vld [vmem:[%s755 + $0x69] sm:$0xff]
      %v1249 = vld [vmem:[%s755 + $0x79] sm:$0xff]
      %v1250 = vld [vmem:[%s755 + $0x81] sm:$0xff]
      %v1251 = vld [vmem:[%s755 + $0x91] sm:$0xff]
      %v1252 = vld [vmem:[%s755 + $0x99] sm:$0xff]
      %v1253 = vld [vmem:[%s755 + $0xa9] sm:$0xff]
      %v1254 = vld [vmem:[%s755 + $0xb1] sm:$0xff]
      %v1255 = vld [vmem:[%s755 + $0xc1] sm:$0xff]
      %v1256 = vld [vmem:[%s755 + $0xc9] sm:$0xff]
      %v1257 = vld [vmem:[%s755 + $0xd9] sm:$0xff]
      %v1258 = vld [vmem:[%s755 + $0xe1] sm:$0xff]
      %v1259 = vld [vmem:[%s755 + $0xf1] sm:$0xff]
      %v1260 = vld [vmem:[%s755 + $0xf9] sm:$0xff]
      %v1261 = vld [vmem:[%s755 + $0x109] sm:$0xff]
      %v1262 = vld [vmem:[%s755 + $0x111] sm:$0xff]
      %v1263 = vld [vmem:[%s755 + $0x121] sm:$0xff]
      %v1264 = vld [vmem:[%s755 + $0x129] sm:$0xff]
      %v1265 = vld [vmem:[%s755 + $0x139] sm:$0xff]
      %v1266 = vld [vmem:[%s755 + $0x141] sm:$0xff]
      %v1267 = vld [vmem:[%s755 + $0x151] sm:$0xff]
      %v1268 = vld [vmem:[%s755 + $0x159] sm:$0xff]
      %v1269 = vld [vmem:[%s755 + $0x169] sm:$0xff]
      %v1270 = vld [vmem:[%s755 + $0x171] sm:$0xff]
      %v1271 = vpack.c.bf16 %v1240, %v1239
      %v1272 = vpack.c.bf16 %v1242, %v1241
      %v1273 = vpack.c.bf16 %v1244, %v1243
      %v1274 = vpack.c.bf16 %v1246, %v1245
      %v1275 = vpack.c.bf16 %v1248, %v1247
      %v1276 = vpack.c.bf16 %v1250, %v1249
      %v1277 = vpack.c.bf16 %v1252, %v1251
      %v1278 = vpack.c.bf16 %v1254, %v1253
      %v1279 = vpack.c.bf16 %v1256, %v1255
      %v1280 = vpack.c.bf16 %v1258, %v1257
      %v1281 = vpack.c.bf16 %v1260, %v1259
      %v1282 = vpack.c.bf16 %v1262, %v1261
      %v1283 = vpack.c.bf16 %v1264, %v1263
      %v1284 = vpack.c.bf16 %v1266, %v1265
      %v1285 = vpack.c.bf16 %v1268, %v1267
      %v1286 = vpack.c.bf16 %v1270, %v1269
      %1303 = vrot.lane.b32.xlu0 %v1271, 16
      %v1304 = vpop.permute.xlu0 %1303
      %1305 = vrot.lane.b32.xlu0 %v1272, 16
      %v1306 = vpop.permute.xlu0 %1305
      %1307 = vrot.lane.b32.xlu0 %v1273, 16
      %v1308 = vpop.permute.xlu0 %1307
      %1309 = vrot.lane.b32.xlu0 %v1274, 16
      %v1310 = vpop.permute.xlu0 %1309
      %1311 = vrot.lane.b32.xlu0 %v1275, 16
      %v1312 = vpop.permute.xlu0 %1311
      %1313 = vrot.lane.b32.xlu0 %v1276, 16
      %v1314 = vpop.permute.xlu0 %1313
      %1315 = vrot.lane.b32.xlu0 %v1277, 16
      %v1316 = vpop.permute.xlu0 %1315
      %1317 = vrot.lane.b32.xlu0 %v1278, 16
      %v1318 = vpop.permute.xlu0 %1317
      %1319 = vrot.lane.b32.xlu0 %v1279, 16
      %v1320 = vpop.permute.xlu0 %1319
      %1321 = vrot.lane.b32.xlu0 %v1280, 16
      %v1322 = vpop.permute.xlu0 %1321
      %1323 = vrot.lane.b32.xlu0 %v1281, 16
      %v1324 = vpop.permute.xlu0 %1323
      %1325 = vrot.lane.b32.xlu0 %v1282, 16
      %v1326 = vpop.permute.xlu0 %1325
      %1327 = vrot.lane.b32.xlu0 %v1283, 16
      %v1328 = vpop.permute.xlu0 %1327
      %1329 = vrot.lane.b32.xlu0 %v1284, 16
      %v1330 = vpop.permute.xlu0 %1329
      %1331 = vrot.lane.b32.xlu0 %v1285, 16
      %v1332 = vpop.permute.xlu0 %1331
      %1333 = vrot.lane.b32.xlu0 %v1286, 16
      %v1334 = vpop.permute.xlu0 %1333
      %vm1351 = vcmask 162944
      %1352 = vst.msk [vmem:[#allocation3] sm:$0xff] %vm1351, %v1304
      %1353 = vst.msk [vmem:[#allocation3 + $0x8] sm:$0xff] %vm1351, %v1306
      %1354 = vst.msk [vmem:[#allocation3 + $0x10] sm:$0xff] %vm1351, %v1308
      %1355 = vst.msk [vmem:[#allocation3 + $0x18] sm:$0xff] %vm1351, %v1310
      %1356 = vst.msk [vmem:[#allocation3 + $0x20] sm:$0xff] %vm1351, %v1312
      %1357 = vst.msk [vmem:[#allocation3 + $0x28] sm:$0xff] %vm1351, %v1314
      %1358 = vst.msk [vmem:[#allocation3 + $0x30] sm:$0xff] %vm1351, %v1316
      %1359 = vst.msk [vmem:[#allocation3 + $0x38] sm:$0xff] %vm1351, %v1318
      %1360 = vst.msk [vmem:[#allocation3 + $0x40] sm:$0xff] %vm1351, %v1320
      %1361 = vst.msk [vmem:[#allocation3 + $0x48] sm:$0xff] %vm1351, %v1322
      %1362 = vst.msk [vmem:[#allocation3 + $0x50] sm:$0xff] %vm1351, %v1324
      %1363 = vst.msk [vmem:[#allocation3 + $0x58] sm:$0xff] %vm1351, %v1326
      %1364 = vst.msk [vmem:[#allocation3 + $0x60] sm:$0xff] %vm1351, %v1328
      %1365 = vst.msk [vmem:[#allocation3 + $0x68] sm:$0xff] %vm1351, %v1330
      %1366 = vst.msk [vmem:[#allocation3 + $0x70] sm:$0xff] %vm1351, %v1332
      %1367 = vst.msk [vmem:[#allocation3 + $0x78] sm:$0xff] %vm1351, %v1334
      %v1368 = vld [vmem:[%s755 + $0x2] sm:$0xff]
      %v1369 = vld [vmem:[%s755 + $0xa] sm:$0xff]
      %v1370 = vld [vmem:[%s755 + $0x1a] sm:$0xff]
      %v1371 = vld [vmem:[%s755 + $0x22] sm:$0xff]
      %v1372 = vld [vmem:[%s755 + $0x32] sm:$0xff]
      %v1373 = vld [vmem:[%s755 + $0x3a] sm:$0xff]
      %v1374 = vld [vmem:[%s755 + $0x4a] sm:$0xff]
      %v1375 = vld [vmem:[%s755 + $0x52] sm:$0xff]
      %v1376 = vld [vmem:[%s755 + $0x62] sm:$0xff]
      %v1377 = vld [vmem:[%s755 + $0x6a] sm:$0xff]
      %v1378 = vld [vmem:[%s755 + $0x7a] sm:$0xff]
      %v1379 = vld [vmem:[%s755 + $0x82] sm:$0xff]
      %v1380 = vld [vmem:[%s755 + $0x92] sm:$0xff]
      %v1381 = vld [vmem:[%s755 + $0x9a] sm:$0xff]
      %v1382 = vld [vmem:[%s755 + $0xaa] sm:$0xff]
      %v1383 = vld [vmem:[%s755 + $0xb2] sm:$0xff]
      %v1384 = vld [vmem:[%s755 + $0xc2] sm:$0xff]
      %v1385 = vld [vmem:[%s755 + $0xca] sm:$0xff]
      %v1386 = vld [vmem:[%s755 + $0xda] sm:$0xff]
      %v1387 = vld [vmem:[%s755 + $0xe2] sm:$0xff]
      %v1388 = vld [vmem:[%s755 + $0xf2] sm:$0xff]
      %v1389 = vld [vmem:[%s755 + $0xfa] sm:$0xff]
      %v1390 = vld [vmem:[%s755 + $0x10a] sm:$0xff]
      %v1391 = vld [vmem:[%s755 + $0x112] sm:$0xff]
      %v1392 = vld [vmem:[%s755 + $0x122] sm:$0xff]
      %v1393 = vld [vmem:[%s755 + $0x12a] sm:$0xff]
      %v1394 = vld [vmem:[%s755 + $0x13a] sm:$0xff]
      %v1395 = vld [vmem:[%s755 + $0x142] sm:$0xff]
      %v1396 = vld [vmem:[%s755 + $0x152] sm:$0xff]
      %v1397 = vld [vmem:[%s755 + $0x15a] sm:$0xff]
      %v1398 = vld [vmem:[%s755 + $0x16a] sm:$0xff]
      %v1399 = vld [vmem:[%s755 + $0x172] sm:$0xff]
      %v1400 = vpack.c.bf16 %v1369, %v1368
      %v1401 = vpack.c.bf16 %v1371, %v1370
      %v1402 = vpack.c.bf16 %v1373, %v1372
      %v1403 = vpack.c.bf16 %v1375, %v1374
      %v1404 = vpack.c.bf16 %v1377, %v1376
      %v1405 = vpack.c.bf16 %v1379, %v1378
      %v1406 = vpack.c.bf16 %v1381, %v1380
      %v1407 = vpack.c.bf16 %v1383, %v1382
      %v1408 = vpack.c.bf16 %v1385, %v1384
      %v1409 = vpack.c.bf16 %v1387, %v1386
      %v1410 = vpack.c.bf16 %v1389, %v1388
      %v1411 = vpack.c.bf16 %v1391, %v1390
      %v1412 = vpack.c.bf16 %v1393, %v1392
      %v1413 = vpack.c.bf16 %v1395, %v1394
      %v1414 = vpack.c.bf16 %v1397, %v1396
      %v1415 = vpack.c.bf16 %v1399, %v1398
      %1432 = vrot.lane.b32.xlu0 %v1400, 20
      %v1433 = vpop.permute.xlu0 %1432
      %1434 = vrot.lane.b32.xlu0 %v1401, 20
      %v1435 = vpop.permute.xlu0 %1434
      %1436 = vrot.lane.b32.xlu0 %v1402, 20
      %v1437 = vpop.permute.xlu0 %1436
      %1438 = vrot.lane.b32.xlu0 %v1403, 20
      %v1439 = vpop.permute.xlu0 %1438
      %1440 = vrot.lane.b32.xlu0 %v1404, 20
      %v1441 = vpop.permute.xlu0 %1440
      %1442 = vrot.lane.b32.xlu0 %v1405, 20
      %v1443 = vpop.permute.xlu0 %1442
      %1444 = vrot.lane.b32.xlu0 %v1406, 20
      %v1445 = vpop.permute.xlu0 %1444
      %1446 = vrot.lane.b32.xlu0 %v1407, 20
      %v1447 = vpop.permute.xlu0 %1446
      %1448 = vrot.lane.b32.xlu0 %v1408, 20
      %v1449 = vpop.permute.xlu0 %1448
      %1450 = vrot.lane.b32.xlu0 %v1409, 20
      %v1451 = vpop.permute.xlu0 %1450
      %1452 = vrot.lane.b32.xlu0 %v1410, 20
      %v1453 = vpop.permute.xlu0 %1452
      %1454 = vrot.lane.b32.xlu0 %v1411, 20
      %v1455 = vpop.permute.xlu0 %1454
      %1456 = vrot.lane.b32.xlu0 %v1412, 20
      %v1457 = vpop.permute.xlu0 %1456
      %1458 = vrot.lane.b32.xlu0 %v1413, 20
      %v1459 = vpop.permute.xlu0 %1458
      %1460 = vrot.lane.b32.xlu0 %v1414, 20
      %v1461 = vpop.permute.xlu0 %1460
      %1462 = vrot.lane.b32.xlu0 %v1415, 20
      %v1463 = vpop.permute.xlu0 %1462
      %vm1480 = vcmask 195744
      %1481 = vst.msk [vmem:[#allocation3] sm:$0xff] %vm1480, %v1433
      %1482 = vst.msk [vmem:[#allocation3 + $0x8] sm:$0xff] %vm1480, %v1435
      %1483 = vst.msk [vmem:[#allocation3 + $0x10] sm:$0xff] %vm1480, %v1437
      %1484 = vst.msk [vmem:[#allocation3 + $0x18] sm:$0xff] %vm1480, %v1439
      %1485 = vst.msk [vmem:[#allocation3 + $0x20] sm:$0xff] %vm1480, %v1441
      %1486 = vst.msk [vmem:[#allocation3 + $0x28] sm:$0xff] %vm1480, %v1443
      %1487 = vst.msk [vmem:[#allocation3 + $0x30] sm:$0xff] %vm1480, %v1445
      %1488 = vst.msk [vmem:[#allocation3 + $0x38] sm:$0xff] %vm1480, %v1447
      %1489 = vst.msk [vmem:[#allocation3 + $0x40] sm:$0xff] %vm1480, %v1449
      %1490 = vst.msk [vmem:[#allocation3 + $0x48] sm:$0xff] %vm1480, %v1451
      %1491 = vst.msk [vmem:[#allocation3 + $0x50] sm:$0xff] %vm1480, %v1453
      %1492 = vst.msk [vmem:[#allocation3 + $0x58] sm:$0xff] %vm1480, %v1455
      %1493 = vst.msk [vmem:[#allocation3 + $0x60] sm:$0xff] %vm1480, %v1457
      %1494 = vst.msk [vmem:[#allocation3 + $0x68] sm:$0xff] %vm1480, %v1459
      %1495 = vst.msk [vmem:[#allocation3 + $0x70] sm:$0xff] %vm1480, %v1461
      %1496 = vst.msk [vmem:[#allocation3 + $0x78] sm:$0xff] %vm1480, %v1463
      %s1497 = scalar_lea.vmem [#allocation2], 48
      %v1498 = vld [vmem:[%s1497] sm:$0xff]
      %v1499 = vld [vmem:[%s1497 + $0x8] sm:$0xff]
      %v1500 = vld [vmem:[%s1497 + $0x18] sm:$0xff]
      %v1501 = vld [vmem:[%s1497 + $0x20] sm:$0xff]
      %v1502 = vld [vmem:[%s1497 + $0x30] sm:$0xff]
      %v1503 = vld [vmem:[%s1497 + $0x38] sm:$0xff]
      %v1504 = vld [vmem:[%s1497 + $0x48] sm:$0xff]
      %v1505 = vld [vmem:[%s1497 + $0x50] sm:$0xff]
      %v1506 = vld [vmem:[%s1497 + $0x60] sm:$0xff]
      %v1507 = vld [vmem:[%s1497 + $0x68] sm:$0xff]
      %v1508 = vld [vmem:[%s1497 + $0x78] sm:$0xff]
      %v1509 = vld [vmem:[%s1497 + $0x80] sm:$0xff]
      %v1510 = vld [vmem:[%s1497 + $0x90] sm:$0xff]
      %v1511 = vld [vmem:[%s1497 + $0x98] sm:$0xff]
      %v1512 = vld [vmem:[%s1497 + $0xa8] sm:$0xff]
      %v1513 = vld [vmem:[%s1497 + $0xb0] sm:$0xff]
      %v1514 = vld [vmem:[%s1497 + $0xc0] sm:$0xff]
      %v1515 = vld [vmem:[%s1497 + $0xc8] sm:$0xff]
      %v1516 = vld [vmem:[%s1497 + $0xd8] sm:$0xff]
      %v1517 = vld [vmem:[%s1497 + $0xe0] sm:$0xff]
      %v1518 = vld [vmem:[%s1497 + $0xf0] sm:$0xff]
      %v1519 = vld [vmem:[%s1497 + $0xf8] sm:$0xff]
      %v1520 = vld [vmem:[%s1497 + $0x108] sm:$0xff]
      %v1521 = vld [vmem:[%s1497 + $0x110] sm:$0xff]
      %v1522 = vld [vmem:[%s1497 + $0x120] sm:$0xff]
      %v1523 = vld [vmem:[%s1497 + $0x128] sm:$0xff]
      %v1524 = vld [vmem:[%s1497 + $0x138] sm:$0xff]
      %v1525 = vld [vmem:[%s1497 + $0x140] sm:$0xff]
      %v1526 = vld [vmem:[%s1497 + $0x150] sm:$0xff]
      %v1527 = vld [vmem:[%s1497 + $0x158] sm:$0xff]
      %v1528 = vld [vmem:[%s1497 + $0x168] sm:$0xff]
      %v1529 = vld [vmem:[%s1497 + $0x170] sm:$0xff]
      %v1530 = vpack.c.bf16 %v1499, %v1498
      %v1531 = vpack.c.bf16 %v1501, %v1500
      %v1532 = vpack.c.bf16 %v1503, %v1502
      %v1533 = vpack.c.bf16 %v1505, %v1504
      %v1534 = vpack.c.bf16 %v1507, %v1506
      %v1535 = vpack.c.bf16 %v1509, %v1508
      %v1536 = vpack.c.bf16 %v1511, %v1510
      %v1537 = vpack.c.bf16 %v1513, %v1512
      %v1538 = vpack.c.bf16 %v1515, %v1514
      %v1539 = vpack.c.bf16 %v1517, %v1516
      %v1540 = vpack.c.bf16 %v1519, %v1518
      %v1541 = vpack.c.bf16 %v1521, %v1520
      %v1542 = vpack.c.bf16 %v1523, %v1522
      %v1543 = vpack.c.bf16 %v1525, %v1524
      %v1544 = vpack.c.bf16 %v1527, %v1526
      %v1545 = vpack.c.bf16 %v1529, %v1528
      %1562 = vrot.lane.b32.xlu0 %v1530, 24
      %v1563 = vpop.permute.xlu0 %1562
      %1564 = vrot.lane.b32.xlu0 %v1531, 24
      %v1565 = vpop.permute.xlu0 %1564
      %1566 = vrot.lane.b32.xlu0 %v1532, 24
      %v1567 = vpop.permute.xlu0 %1566
      %1568 = vrot.lane.b32.xlu0 %v1533, 24
      %v1569 = vpop.permute.xlu0 %1568
      %1570 = vrot.lane.b32.xlu0 %v1534, 24
      %v1571 = vpop.permute.xlu0 %1570
      %1572 = vrot.lane.b32.xlu0 %v1535, 24
      %v1573 = vpop.permute.xlu0 %1572
      %1574 = vrot.lane.b32.xlu0 %v1536, 24
      %v1575 = vpop.permute.xlu0 %1574
      %1576 = vrot.lane.b32.xlu0 %v1537, 24
      %v1577 = vpop.permute.xlu0 %1576
      %1578 = vrot.lane.b32.xlu0 %v1538, 24
      %v1579 = vpop.permute.xlu0 %1578
      %1580 = vrot.lane.b32.xlu0 %v1539, 24
      %v1581 = vpop.permute.xlu0 %1580
      %1582 = vrot.lane.b32.xlu0 %v1540, 24
      %v1583 = vpop.permute.xlu0 %1582
      %1584 = vrot.lane.b32.xlu0 %v1541, 24
      %v1585 = vpop.permute.xlu0 %1584
      %1586 = vrot.lane.b32.xlu0 %v1542, 24
      %v1587 = vpop.permute.xlu0 %1586
      %1588 = vrot.lane.b32.xlu0 %v1543, 24
      %v1589 = vpop.permute.xlu0 %1588
      %1590 = vrot.lane.b32.xlu0 %v1544, 24
      %v1591 = vpop.permute.xlu0 %1590
      %1592 = vrot.lane.b32.xlu0 %v1545, 24
      %v1593 = vpop.permute.xlu0 %1592
      %vm1610 = vcmask 228544
      %1611 = vst.msk [vmem:[#allocation3] sm:$0xff] %vm1610, %v1563
      %1612 = vst.msk [vmem:[#allocation3 + $0x8] sm:$0xff] %vm1610, %v1565
      %1613 = vst.msk [vmem:[#allocation3 + $0x10] sm:$0xff] %vm1610, %v1567
      %1614 = vst.msk [vmem:[#allocation3 + $0x18] sm:$0xff] %vm1610, %v1569
      %1615 = vst.msk [vmem:[#allocation3 + $0x20] sm:$0xff] %vm1610, %v1571
      %1616 = vst.msk [vmem:[#allocation3 + $0x28] sm:$0xff] %vm1610, %v1573
      %1617 = vst.msk [vmem:[#allocation3 + $0x30] sm:$0xff] %vm1610, %v1575
      %1618 = vst.msk [vmem:[#allocation3 + $0x38] sm:$0xff] %vm1610, %v1577
      %1619 = vst.msk [vmem:[#allocation3 + $0x40] sm:$0xff] %vm1610, %v1579
      %1620 = vst.msk [vmem:[#allocation3 + $0x48] sm:$0xff] %vm1610, %v1581
      %1621 = vst.msk [vmem:[#allocation3 + $0x50] sm:$0xff] %vm1610, %v1583
      %1622 = vst.msk [vmem:[#allocation3 + $0x58] sm:$0xff] %vm1610, %v1585
      %1623 = vst.msk [vmem:[#allocation3 + $0x60] sm:$0xff] %vm1610, %v1587
      %1624 = vst.msk [vmem:[#allocation3 + $0x68] sm:$0xff] %vm1610, %v1589
      %1625 = vst.msk [vmem:[#allocation3 + $0x70] sm:$0xff] %vm1610, %v1591
      %1626 = vst.msk [vmem:[#allocation3 + $0x78] sm:$0xff] %vm1610, %v1593
      %v1627 = vld [vmem:[%s1497 + $0x1] sm:$0xff]
      %v1628 = vld [vmem:[%s1497 + $0x9] sm:$0xff]
      %v1629 = vld [vmem:[%s1497 + $0x19] sm:$0xff]
      %v1630 = vld [vmem:[%s1497 + $0x21] sm:$0xff]
      %v1631 = vld [vmem:[%s1497 + $0x31] sm:$0xff]
      %v1632 = vld [vmem:[%s1497 + $0x39] sm:$0xff]
      %v1633 = vld [vmem:[%s1497 + $0x49] sm:$0xff]
      %v1634 = vld [vmem:[%s1497 + $0x51] sm:$0xff]
      %v1635 = vld [vmem:[%s1497 + $0x61] sm:$0xff]
      %v1636 = vld [vmem:[%s1497 + $0x69] sm:$0xff]
      %v1637 = vld [vmem:[%s1497 + $0x79] sm:$0xff]
      %v1638 = vld [vmem:[%s1497 + $0x81] sm:$0xff]
      %v1639 = vld [vmem:[%s1497 + $0x91] sm:$0xff]
      %v1640 = vld [vmem:[%s1497 + $0x99] sm:$0xff]
      %v1641 = vld [vmem:[%s1497 + $0xa9] sm:$0xff]
      %v1642 = vld [vmem:[%s1497 + $0xb1] sm:$0xff]
      %v1643 = vld [vmem:[%s1497 + $0xc1] sm:$0xff]
      %v1644 = vld [vmem:[%s1497 + $0xc9] sm:$0xff]
      %v1645 = vld [vmem:[%s1497 + $0xd9] sm:$0xff]
      %v1646 = vld [vmem:[%s1497 + $0xe1] sm:$0xff]
      %v1647 = vld [vmem:[%s1497 + $0xf1] sm:$0xff]
      %v1648 = vld [vmem:[%s1497 + $0xf9] sm:$0xff]
      %v1649 = vld [vmem:[%s1497 + $0x109] sm:$0xff]
      %v1650 = vld [vmem:[%s1497 + $0x111] sm:$0xff]
      %v1651 = vld [vmem:[%s1497 + $0x121] sm:$0xff]
      %v1652 = vld [vmem:[%s1497 + $0x129] sm:$0xff]
      %v1653 = vld [vmem:[%s1497 + $0x139] sm:$0xff]
      %v1654 = vld [vmem:[%s1497 + $0x141] sm:$0xff]
      %v1655 = vld [vmem:[%s1497 + $0x151] sm:$0xff]
      %v1656 = vld [vmem:[%s1497 + $0x159] sm:$0xff]
      %v1657 = vld [vmem:[%s1497 + $0x169] sm:$0xff]
      %v1658 = vld [vmem:[%s1497 + $0x171] sm:$0xff]
      %v1659 = vpack.c.bf16 %v1628, %v1627
      %v1660 = vpack.c.bf16 %v1630, %v1629
      %v1661 = vpack.c.bf16 %v1632, %v1631
      %v1662 = vpack.c.bf16 %v1634, %v1633
      %v1663 = vpack.c.bf16 %v1636, %v1635
      %v1664 = vpack.c.bf16 %v1638, %v1637
      %v1665 = vpack.c.bf16 %v1640, %v1639
      %v1666 = vpack.c.bf16 %v1642, %v1641
      %v1667 = vpack.c.bf16 %v1644, %v1643
      %v1668 = vpack.c.bf16 %v1646, %v1645
      %v1669 = vpack.c.bf16 %v1648, %v1647
      %v1670 = vpack.c.bf16 %v1650, %v1649
      %v1671 = vpack.c.bf16 %v1652, %v1651
      %v1672 = vpack.c.bf16 %v1654, %v1653
      %v1673 = vpack.c.bf16 %v1656, %v1655
      %v1674 = vpack.c.bf16 %v1658, %v1657
      %1691 = vrot.lane.b32.xlu0 %v1659, 28
      %v1692 = vpop.permute.xlu0 %1691
      %1693 = vrot.lane.b32.xlu0 %v1660, 28
      %v1694 = vpop.permute.xlu0 %1693
      %1695 = vrot.lane.b32.xlu0 %v1661, 28
      %v1696 = vpop.permute.xlu0 %1695
      %1697 = vrot.lane.b32.xlu0 %v1662, 28
      %v1698 = vpop.permute.xlu0 %1697
      %1699 = vrot.lane.b32.xlu0 %v1663, 28
      %v1700 = vpop.permute.xlu0 %1699
      %1701 = vrot.lane.b32.xlu0 %v1664, 28
      %v1702 = vpop.permute.xlu0 %1701
      %1703 = vrot.lane.b32.xlu0 %v1665, 28
      %v1704 = vpop.permute.xlu0 %1703
      %1705 = vrot.lane.b32.xlu0 %v1666, 28
      %v1706 = vpop.permute.xlu0 %1705
      %1707 = vrot.lane.b32.xlu0 %v1667, 28
      %v1708 = vpop.permute.xlu0 %1707
      %1709 = vrot.lane.b32.xlu0 %v1668, 28
      %v1710 = vpop.permute.xlu0 %1709
      %1711 = vrot.lane.b32.xlu0 %v1669, 28
      %v1712 = vpop.permute.xlu0 %1711
      %1713 = vrot.lane.b32.xlu0 %v1670, 28
      %v1714 = vpop.permute.xlu0 %1713
      %1715 = vrot.lane.b32.xlu0 %v1671, 28
      %v1716 = vpop.permute.xlu0 %1715
      %1717 = vrot.lane.b32.xlu0 %v1672, 28
      %v1718 = vpop.permute.xlu0 %1717
      %1719 = vrot.lane.b32.xlu0 %v1673, 28
      %v1720 = vpop.permute.xlu0 %1719
      %1721 = vrot.lane.b32.xlu0 %v1674, 28
      %v1722 = vpop.permute.xlu0 %1721
      %vm1739 = vcmask 261344
      %1740 = vst.msk [vmem:[#allocation3] sm:$0xff] %vm1739, %v1692
      %1741 = vst.msk [vmem:[#allocation3 + $0x8] sm:$0xff] %vm1739, %v1694
      %1742 = vst.msk [vmem:[#allocation3 + $0x10] sm:$0xff] %vm1739, %v1696
      %1743 = vst.msk [vmem:[#allocation3 + $0x18] sm:$0xff] %vm1739, %v1698
      %1744 = vst.msk [vmem:[#allocation3 + $0x20] sm:$0xff] %vm1739, %v1700
      %1745 = vst.msk [vmem:[#allocation3 + $0x28] sm:$0xff] %vm1739, %v1702
      %1746 = vst.msk [vmem:[#allocation3 + $0x30] sm:$0xff] %vm1739, %v1704
      %1747 = vst.msk [vmem:[#allocation3 + $0x38] sm:$0xff] %vm1739, %v1706
      %1748 = vst.msk [vmem:[#allocation3 + $0x40] sm:$0xff] %vm1739, %v1708
      %1749 = vst.msk [vmem:[#allocation3 + $0x48] sm:$0xff] %vm1739, %v1710
      %1750 = vst.msk [vmem:[#allocation3 + $0x50] sm:$0xff] %vm1739, %v1712
      %1751 = vst.msk [vmem:[#allocation3 + $0x58] sm:$0xff] %vm1739, %v1714
      %1752 = vst.msk [vmem:[#allocation3 + $0x60] sm:$0xff] %vm1739, %v1716
      %1753 = vst.msk [vmem:[#allocation3 + $0x68] sm:$0xff] %vm1739, %v1718
      %1754 = vst.msk [vmem:[#allocation3 + $0x70] sm:$0xff] %vm1739, %v1720
      %1755 = vst.msk [vmem:[#allocation3 + $0x78] sm:$0xff] %vm1739, %v1722
      %v1756 = vld [vmem:[%s1497 + $0x2] sm:$0xff]
      %v1757 = vld [vmem:[%s1497 + $0xa] sm:$0xff]
      %v1758 = vld [vmem:[%s1497 + $0x1a] sm:$0xff]
      %v1759 = vld [vmem:[%s1497 + $0x22] sm:$0xff]
      %v1760 = vld [vmem:[%s1497 + $0x32] sm:$0xff]
      %v1761 = vld [vmem:[%s1497 + $0x3a] sm:$0xff]
      %v1762 = vld [vmem:[%s1497 + $0x4a] sm:$0xff]
      %v1763 = vld [vmem:[%s1497 + $0x52] sm:$0xff]
      %v1764 = vld [vmem:[%s1497 + $0x62] sm:$0xff]
      %v1765 = vld [vmem:[%s1497 + $0x6a] sm:$0xff]
      %v1766 = vld [vmem:[%s1497 + $0x7a] sm:$0xff]
      %v1767 = vld [vmem:[%s1497 + $0x82] sm:$0xff]
      %v1768 = vld [vmem:[%s1497 + $0x92] sm:$0xff]
      %v1769 = vld [vmem:[%s1497 + $0x9a] sm:$0xff]
      %v1770 = vld [vmem:[%s1497 + $0xaa] sm:$0xff]
      %v1771 = vld [vmem:[%s1497 + $0xb2] sm:$0xff]
      %v1772 = vld [vmem:[%s1497 + $0xc2] sm:$0xff]
      %v1773 = vld [vmem:[%s1497 + $0xca] sm:$0xff]
      %v1774 = vld [vmem:[%s1497 + $0xda] sm:$0xff]
      %v1775 = vld [vmem:[%s1497 + $0xe2] sm:$0xff]
      %v1776 = vld [vmem:[%s1497 + $0xf2] sm:$0xff]
      %v1777 = vld [vmem:[%s1497 + $0xfa] sm:$0xff]
      %v1778 = vld [vmem:[%s1497 + $0x10a] sm:$0xff]
      %v1779 = vld [vmem:[%s1497 + $0x112] sm:$0xff]
      %v1780 = vld [vmem:[%s1497 + $0x122] sm:$0xff]
      %v1781 = vld [vmem:[%s1497 + $0x12a] sm:$0xff]
      %v1782 = vld [vmem:[%s1497 + $0x13a] sm:$0xff]
      %v1783 = vld [vmem:[%s1497 + $0x142] sm:$0xff]
      %v1784 = vld [vmem:[%s1497 + $0x152] sm:$0xff]
      %v1785 = vld [vmem:[%s1497 + $0x15a] sm:$0xff]
      %v1786 = vld [vmem:[%s1497 + $0x16a] sm:$0xff]
      %v1787 = vld [vmem:[%s1497 + $0x172] sm:$0xff]
      %v1788 = vpack.c.bf16 %v1757, %v1756
      %v1789 = vpack.c.bf16 %v1759, %v1758
      %v1790 = vpack.c.bf16 %v1761, %v1760
      %v1791 = vpack.c.bf16 %v1763, %v1762
      %v1792 = vpack.c.bf16 %v1765, %v1764
      %v1793 = vpack.c.bf16 %v1767, %v1766
      %v1794 = vpack.c.bf16 %v1769, %v1768
      %v1795 = vpack.c.bf16 %v1771, %v1770
      %v1796 = vpack.c.bf16 %v1773, %v1772
      %v1797 = vpack.c.bf16 %v1775, %v1774
      %v1798 = vpack.c.bf16 %v1777, %v1776
      %v1799 = vpack.c.bf16 %v1779, %v1778
      %v1800 = vpack.c.bf16 %v1781, %v1780
      %v1801 = vpack.c.bf16 %v1783, %v1782
      %v1802 = vpack.c.bf16 %v1785, %v1784
      %v1803 = vpack.c.bf16 %v1787, %v1786
      %1820 = vrot.lane.b32.xlu0 %v1788, 32
      %v1821 = vpop.permute.xlu0 %1820
      %1822 = vrot.lane.b32.xlu0 %v1789, 32
      %v1823 = vpop.permute.xlu0 %1822
      %1824 = vrot.lane.b32.xlu0 %v1790, 32
      %v1825 = vpop.permute.xlu0 %1824
      %1826 = vrot.lane.b32.xlu0 %v1791, 32
      %v1827 = vpop.permute.xlu0 %1826
      %1828 = vrot.lane.b32.xlu0 %v1792, 32
      %v1829 = vpop.permute.xlu0 %1828
      %1830 = vrot.lane.b32.xlu0 %v1793, 32
      %v1831 = vpop.permute.xlu0 %1830
      %1832 = vrot.lane.b32.xlu0 %v1794, 32
      %v1833 = vpop.permute.xlu0 %1832
      %1834 = vrot.lane.b32.xlu0 %v1795, 32
      %v1835 = vpop.permute.xlu0 %1834
      %1836 = vrot.lane.b32.xlu0 %v1796, 32
      %v1837 = vpop.permute.xlu0 %1836
      %1838 = vrot.lane.b32.xlu0 %v1797, 32
      %v1839 = vpop.permute.xlu0 %1838
      %1840 = vrot.lane.b32.xlu0 %v1798, 32
      %v1841 = vpop.permute.xlu0 %1840
      %1842 = vrot.lane.b32.xlu0 %v1799, 32
      %v1843 = vpop.permute.xlu0 %1842
      %1844 = vrot.lane.b32.xlu0 %v1800, 32
      %v1845 = vpop.permute.xlu0 %1844
      %1846 = vrot.lane.b32.xlu0 %v1801, 32
      %v1847 = vpop.permute.xlu0 %1846
      %1848 = vrot.lane.b32.xlu0 %v1802, 32
      %v1849 = vpop.permute.xlu0 %1848
      %1850 = vrot.lane.b32.xlu0 %v1803, 32
      %v1851 = vpop.permute.xlu0 %1850
      %vm1868 = vcmask 294144
      %1869 = vst.msk [vmem:[#allocation3] sm:$0xff] %vm1868, %v1821
      %1870 = vst.msk [vmem:[#allocation3 + $0x8] sm:$0xff] %vm1868, %v1823
      %1871 = vst.msk [vmem:[#allocation3 + $0x10] sm:$0xff] %vm1868, %v1825
      %1872 = vst.msk [vmem:[#allocation3 + $0x18] sm:$0xff] %vm1868, %v1827
      %1873 = vst.msk [vmem:[#allocation3 + $0x20] sm:$0xff] %vm1868, %v1829
      %1874 = vst.msk [vmem:[#allocation3 + $0x28] sm:$0xff] %vm1868, %v1831
      %1875 = vst.msk [vmem:[#allocation3 + $0x30] sm:$0xff] %vm1868, %v1833
      %1876 = vst.msk [vmem:[#allocation3 + $0x38] sm:$0xff] %vm1868, %v1835
      %1877 = vst.msk [vmem:[#allocation3 + $0x40] sm:$0xff] %vm1868, %v1837
      %1878 = vst.msk [vmem:[#allocation3 + $0x48] sm:$0xff] %vm1868, %v1839
      %1879 = vst.msk [vmem:[#allocation3 + $0x50] sm:$0xff] %vm1868, %v1841
      %1880 = vst.msk [vmem:[#allocation3 + $0x58] sm:$0xff] %vm1868, %v1843
      %1881 = vst.msk [vmem:[#allocation3 + $0x60] sm:$0xff] %vm1868, %v1845
      %1882 = vst.msk [vmem:[#allocation3 + $0x68] sm:$0xff] %vm1868, %v1847
      %1883 = vst.msk [vmem:[#allocation3 + $0x70] sm:$0xff] %vm1868, %v1849
      %1884 = vst.msk [vmem:[#allocation3 + $0x78] sm:$0xff] %vm1868, %v1851
      %v1885 = vld [vmem:[#allocation3] sm:$0xff]
      %v1886 = vld [vmem:[#allocation3 + $0x8] sm:$0xff]
      %v1887 = vld [vmem:[#allocation3 + $0x10] sm:$0xff]
      %v1888 = vld [vmem:[#allocation3 + $0x18] sm:$0xff]
      %v1889 = vld [vmem:[#allocation3 + $0x20] sm:$0xff]
      %v1890 = vld [vmem:[#allocation3 + $0x28] sm:$0xff]
      %v1891 = vld [vmem:[#allocation3 + $0x30] sm:$0xff]
      %v1892 = vld [vmem:[#allocation3 + $0x38] sm:$0xff]
      %v1893 = vld [vmem:[#allocation3 + $0x40] sm:$0xff]
      %v1894 = vld [vmem:[#allocation3 + $0x48] sm:$0xff]
      %v1895 = vld [vmem:[#allocation3 + $0x50] sm:$0xff]
      %v1896 = vld [vmem:[#allocation3 + $0x58] sm:$0xff]
      %v1897 = vld [vmem:[#allocation3 + $0x60] sm:$0xff]
      %v1898 = vld [vmem:[#allocation3 + $0x68] sm:$0xff]
      %v1899 = vld [vmem:[#allocation3 + $0x70] sm:$0xff]
      %v1900 = vld [vmem:[#allocation3 + $0x78] sm:$0xff]
      %v1901 = vld [vmem:[%s3] sm:$0xf]
      %v1902 = vld [vmem:[%s3 + $0x4] sm:$0xf]
      %v1903 = vld [vmem:[%s3 + $0x8] sm:$0xf]
      %v1904 = vld [vmem:[%s3 + $0xc] sm:$0xf]
      %v1905 = vld [vmem:[%s3 + $0x10] sm:$0x3]
      %v1906 = vld [vmem:[%s4] sm:$0x1]
      %v1908 = vlaneseq
      %v1909 = vshrl.u32 %v1908, 7
      %v1910 = vsub.s32 0, %v1909
      %v1911 = vrot.slane %v1906, %v1910
      %v1918 = vunpack.c.l.b16 %v1901
      %v1919 = vunpack.c.l.b16 %v1902
      %v1920 = vunpack.c.l.b16 %v1903
      %v1921 = vunpack.c.l.b16 %v1904
      %v1922 = vunpack.c.l.b16 %v1905
      %v1923 = vpack.c.b16 %v1919, %v1918
      %v1924 = vpack.c.b16 %v1921, %v1920
      %v1925 = vpack.c.b16 %v1922, %v1922
      %vm1928 = vcmask 293888
      %v1930 = vsel %vm1928, %v1885, 0
      %v1933 = vsel %vm1928, %v1886, 0
      %v1936 = vsel %vm1928, %v1887, 0
      %v1939 = vsel %vm1928, %v1888, 0
      %v1942 = vsel %vm1928, %v1889, 0
      %v1945 = vsel %vm1928, %v1890, 0
      %v1948 = vsel %vm1928, %v1891, 0
      %v1951 = vsel %vm1928, %v1892, 0
      %v1954 = vsel %vm1928, %v1893, 0
      %v1957 = vsel %vm1928, %v1894, 0
      %v1960 = vsel %vm1928, %v1895, 0
      %v1963 = vsel %vm1928, %v1896, 0
      %v1966 = vsel %vm1928, %v1897, 0
      %v1969 = vsel %vm1928, %v1898, 0
      %v1972 = vsel %vm1928, %v1899, 0
      %v1975 = vsel %vm1928, %v1900, 0
      %v1978 = vsel %vm503, %v1925, 0
      %1980 = vmatprep.subr.bf16.mxu0 0
      %1981 = vmatpush1.bf16.msra.mxu0 %v1923
      %1982 = vmatprep.subr.bf16.mxu0 0
      %1983 = vmatpush1.bf16.msra.mxu0 %v1924
      %1984 = vmatprep.subr.bf16.mxu0 0
      %1985 = vmatpush1.bf16.msra.mxu0 %v1978
      %1986 = vmatprep.subr.bf16.mxu0 0
      %1987 = vmatpush1.bf16.msra.mxu0 0
      %1988 = vmatprep.subr.bf16.mxu0 0
      %1989 = vmatpush1.bf16.msra.mxu0 0
      %1990 = vmatprep.subr.bf16.mxu0 0
      %1991 = vmatpush1.bf16.msra.mxu0 0
      %1992 = vmatprep.subr.bf16.mxu0 0
      %1993 = vmatpush1.bf16.msra.mxu0 0
      %1994 = vmatprep.subr.bf16.mxu0 0
      %1995 = vmatpush1.bf16.msra.mxu0 0
      %1996 = vmatprep.subr.bf16.mxu0 0
      %1997 = vmatpush1.bf16.msra.mxu0 0
      %1998 = vmatprep.subr.bf16.mxu0 0
      %1999 = vmatpush1.bf16.msra.mxu0 0
      %2000 = vmatprep.subr.bf16.mxu0 0
      %2001 = vmatpush1.bf16.msra.mxu0 0
      %2002 = vmatprep.subr.bf16.mxu0 0
      %2003 = vmatpush1.bf16.msra.mxu0 0
      %2004 = vmatprep.subr.bf16.mxu0 0
      %2005 = vmatpush1.bf16.msra.mxu0 0
      %2006 = vmatprep.subr.bf16.mxu0 0
      %2007 = vmatpush1.bf16.msra.mxu0 0
      %2008 = vmatprep.subr.bf16.mxu0 0
      %2009 = vmatpush1.bf16.msra.mxu0 0
      %2010 = vmatprep.subr.bf16.mxu0 0
      %2011 = vmatpush1.bf16.msra.mxu0 0
      %2012 = vmatprep.mubr.bf16.mxu0 0
      %2013 = vmatmul.mubr.bf16.gmra.mrb[0].mxu0 %v1930
      %v2014 = vpop.f32.mrb[0].mxu0
      %v2015 = vadd.f32 %v1911, %v2014
      %v2016 = vpop.f32.mrb[0].mxu0
      %v2017 = vpop.f32.mrb[0].mxu0
      %v2018 = vadd.f32 %v1911, %v2017
      %v2019 = vpop.f32.mrb[0].mxu0
      %2020 = vmatprep.mubr.bf16.mxu0 0
      %2021 = vmatmul.mubr.bf16.gmra.mrb[0].mxu0 %v1933
      %v2022 = vpop.f32.mrb[0].mxu0
      %v2023 = vadd.f32 %v1911, %v2022
      %v2024 = vpop.f32.mrb[0].mxu0
      %v2025 = vpop.f32.mrb[0].mxu0
      %v2026 = vadd.f32 %v1911, %v2025
      %v2027 = vpop.f32.mrb[0].mxu0
      %2028 = vmatprep.mubr.bf16.mxu0 0
      %2029 = vmatmul.mubr.bf16.gmra.mrb[0].mxu0 %v1936
      %v2030 = vpop.f32.mrb[0].mxu0
      %v2031 = vadd.f32 %v1911, %v2030
      %v2032 = vpop.f32.mrb[0].mxu0
      %v2033 = vpop.f32.mrb[0].mxu0
      %v2034 = vadd.f32 %v1911, %v2033
      %v2035 = vpop.f32.mrb[0].mxu0
      %2036 = vmatprep.mubr.bf16.mxu0 0
      %2037 = vmatmul.mubr.bf16.gmra.mrb[0].mxu0 %v1939
      %v2038 = vpop.f32.mrb[0].mxu0
      %v2039 = vadd.f32 %v1911, %v2038
      %v2040 = vpop.f32.mrb[0].mxu0
      %v2041 = vpop.f32.mrb[0].mxu0
      %v2042 = vadd.f32 %v1911, %v2041
      %v2043 = vpop.f32.mrb[0].mxu0
      %2044 = vmatprep.mubr.bf16.mxu0 0
      %2045 = vmatmul.mubr.bf16.gmra.mrb[0].mxu0 %v1942
      %v2046 = vpop.f32.mrb[0].mxu0
      %v2047 = vadd.f32 %v1911, %v2046
      %v2048 = vpop.f32.mrb[0].mxu0
      %v2049 = vpop.f32.mrb[0].mxu0
      %v2050 = vadd.f32 %v1911, %v2049
      %v2051 = vpop.f32.mrb[0].mxu0
      %2052 = vmatprep.mubr.bf16.mxu0 0
      %2053 = vmatmul.mubr.bf16.gmra.mrb[0].mxu0 %v1945
      %v2054 = vpop.f32.mrb[0].mxu0
      %v2055 = vadd.f32 %v1911, %v2054
      %v2056 = vpop.f32.mrb[0].mxu0
      %v2057 = vpop.f32.mrb[0].mxu0
      %v2058 = vadd.f32 %v1911, %v2057
      %v2059 = vpop.f32.mrb[0].mxu0
      %2060 = vmatprep.mubr.bf16.mxu0 0
      %2061 = vmatmul.mubr.bf16.gmra.mrb[0].mxu0 %v1948
      %v2062 = vpop.f32.mrb[0].mxu0
      %v2063 = vadd.f32 %v1911, %v2062
      %v2064 = vpop.f32.mrb[0].mxu0
      %v2065 = vpop.f32.mrb[0].mxu0
      %v2066 = vadd.f32 %v1911, %v2065
      %v2067 = vpop.f32.mrb[0].mxu0
      %2068 = vmatprep.mubr.bf16.mxu0 0
      %2069 = vmatmul.mubr.bf16.gmra.mrb[0].mxu0 %v1951
      %v2070 = vpop.f32.mrb[0].mxu0
      %v2071 = vadd.f32 %v1911, %v2070
      %v2072 = vpop.f32.mrb[0].mxu0
      %v2073 = vpop.f32.mrb[0].mxu0
      %v2074 = vadd.f32 %v1911, %v2073
      %v2075 = vpop.f32.mrb[0].mxu0
      %2076 = vmatprep.mubr.bf16.mxu0 0
      %2077 = vmatmul.mubr.bf16.gmra.mrb[0].mxu0 %v1954
      %v2078 = vpop.f32.mrb[0].mxu0
      %v2079 = vadd.f32 %v1911, %v2078
      %v2080 = vpop.f32.mrb[0].mxu0
      %v2081 = vpop.f32.mrb[0].mxu0
      %v2082 = vadd.f32 %v1911, %v2081
      %v2083 = vpop.f32.mrb[0].mxu0
      %2084 = vmatprep.mubr.bf16.mxu0 0
      %2085 = vmatmul.mubr.bf16.gmra.mrb[0].mxu0 %v1957
      %v2086 = vpop.f32.mrb[0].mxu0
      %v2087 = vadd.f32 %v1911, %v2086
      %v2088 = vpop.f32.mrb[0].mxu0
      %v2089 = vpop.f32.mrb[0].mxu0
      %v2090 = vadd.f32 %v1911, %v2089
      %v2091 = vpop.f32.mrb[0].mxu0
      %2092 = vmatprep.mubr.bf16.mxu0 0
      %2093 = vmatmul.mubr.bf16.gmra.mrb[0].mxu0 %v1960
      %v2094 = vpop.f32.mrb[0].mxu0
      %v2095 = vadd.f32 %v1911, %v2094
      %v2096 = vpop.f32.mrb[0].mxu0
      %v2097 = vpop.f32.mrb[0].mxu0
      %v2098 = vadd.f32 %v1911, %v2097
      %v2099 = vpop.f32.mrb[0].mxu0
      %2100 = vmatprep.mubr.bf16.mxu0 0
      %2101 = vmatmul.mubr.bf16.gmra.mrb[0].mxu0 %v1963
      %v2102 = vpop.f32.mrb[0].mxu0
      %v2103 = vadd.f32 %v1911, %v2102
      %v2104 = vpop.f32.mrb[0].mxu0
      %v2105 = vpop.f32.mrb[0].mxu0
      %v2106 = vadd.f32 %v1911, %v2105
      %v2107 = vpop.f32.mrb[0].mxu0
      %2108 = vmatprep.mubr.bf16.mxu0 0
      %2109 = vmatmul.mubr.bf16.gmra.mrb[0].mxu0 %v1966
      %v2110 = vpop.f32.mrb[0].mxu0
      %v2111 = vadd.f32 %v1911, %v2110
      %v2112 = vpop.f32.mrb[0].mxu0
      %v2113 = vpop.f32.mrb[0].mxu0
      %v2114 = vadd.f32 %v1911, %v2113
      %v2115 = vpop.f32.mrb[0].mxu0
      %2116 = vmatprep.mubr.bf16.mxu0 0
      %2117 = vmatmul.mubr.bf16.gmra.mrb[0].mxu0 %v1969
      %v2118 = vpop.f32.mrb[0].mxu0
      %v2119 = vadd.f32 %v1911, %v2118
      %v2120 = vpop.f32.mrb[0].mxu0
      %v2121 = vpop.f32.mrb[0].mxu0
      %v2122 = vadd.f32 %v1911, %v2121
      %v2123 = vpop.f32.mrb[0].mxu0
      %2124 = vmatprep.mubr.bf16.mxu0 0
      %2125 = vmatmul.mubr.bf16.gmra.mrb[0].mxu0 %v1972
      %v2126 = vpop.f32.mrb[0].mxu0
      %v2127 = vadd.f32 %v1911, %v2126
      %v2128 = vpop.f32.mrb[0].mxu0
      %v2129 = vpop.f32.mrb[0].mxu0
      %v2130 = vadd.f32 %v1911, %v2129
      %v2131 = vpop.f32.mrb[0].mxu0
      %2132 = vmatprep.mubr.bf16.mxu0 0
      %2133 = vmatmul.mubr.bf16.gmra.mrb[0].mxu0 %v1975
      %v2134 = vpop.f32.mrb[0].mxu0
      %v2135 = vadd.f32 %v1911, %v2134
      %v2136 = vpop.f32.mrb[0].mxu0
      %v2137 = vpop.f32.mrb[0].mxu0
      %v2138 = vadd.f32 %v1911, %v2137
      %v2139 = vpop.f32.mrb[0].mxu0
      %2140 = vdwg.mxu0
      %v2141 = vmax.f32 %v2015, 0.0
      %v2142 = vmax.f32 %v2018, 0.0
      %v2143 = vmax.f32 %v2023, 0.0
      %v2144 = vmax.f32 %v2026, 0.0
      %v2145 = vmax.f32 %v2031, 0.0
      %v2146 = vmax.f32 %v2034, 0.0
      %v2147 = vmax.f32 %v2039, 0.0
      %v2148 = vmax.f32 %v2042, 0.0
      %v2149 = vmax.f32 %v2047, 0.0
      %v2150 = vmax.f32 %v2050, 0.0
      %v2151 = vmax.f32 %v2055, 0.0
      %v2152 = vmax.f32 %v2058, 0.0
      %v2153 = vmax.f32 %v2063, 0.0
      %v2154 = vmax.f32 %v2066, 0.0
      %v2155 = vmax.f32 %v2071, 0.0
      %v2156 = vmax.f32 %v2074, 0.0
      %v2157 = vmax.f32 %v2079, 0.0
      %v2158 = vmax.f32 %v2082, 0.0
      %v2159 = vmax.f32 %v2087, 0.0
      %v2160 = vmax.f32 %v2090, 0.0
      %v2161 = vmax.f32 %v2095, 0.0
      %v2162 = vmax.f32 %v2098, 0.0
      %v2163 = vmax.f32 %v2103, 0.0
      %v2164 = vmax.f32 %v2106, 0.0
      %v2165 = vmax.f32 %v2111, 0.0
      %v2166 = vmax.f32 %v2114, 0.0
      %v2167 = vmax.f32 %v2119, 0.0
      %v2168 = vmax.f32 %v2122, 0.0
      %v2169 = vmax.f32 %v2127, 0.0
      %v2170 = vmax.f32 %v2130, 0.0
      %v2171 = vmax.f32 %v2135, 0.0
      %v2172 = vmax.f32 %v2138, 0.0
      %v2173 = vpack.c.bf16 %v2142, %v2141
      %v2174 = vpack.c.bf16 %v2144, %v2143
      %v2175 = vpack.c.bf16 %v2146, %v2145
      %v2176 = vpack.c.bf16 %v2148, %v2147
      %v2177 = vpack.c.bf16 %v2150, %v2149
      %v2178 = vpack.c.bf16 %v2152, %v2151
      %v2179 = vpack.c.bf16 %v2154, %v2153
      %v2180 = vpack.c.bf16 %v2156, %v2155
      %v2181 = vpack.c.bf16 %v2158, %v2157
      %v2182 = vpack.c.bf16 %v2160, %v2159
      %v2183 = vpack.c.bf16 %v2162, %v2161
      %v2184 = vpack.c.bf16 %v2164, %v2163
      %v2185 = vpack.c.bf16 %v2166, %v2165
      %v2186 = vpack.c.bf16 %v2168, %v2167
      %v2187 = vpack.c.bf16 %v2170, %v2169
      %v2188 = vpack.c.bf16 %v2172, %v2171
      %v2189 = vld [vmem:[%s7] sm:$0x3]
      %v2190 = vld [vmem:[%s8] sm:$0x1]
      %v2192 = vlaneseq
      %v2193 = vshrl.u32 %v2192, 7
      %v2194 = vsub.s32 0, %v2193
      %v2195 = vrot.slane %v2190, %v2194
      %v2198 = vsel %vm503, %v2189, 0
      %2200 = vmatprep.subr.bf16.mxu0 0
      %2201 = vmatpush1.bf16.msra.mxu0 %v2198
      %2202 = vmatprep.subr.bf16.mxu0 0
      %2203 = vmatpush1.bf16.msra.mxu0 0
      %2204 = vmatprep.subr.bf16.mxu0 0
      %2205 = vmatpush1.bf16.msra.mxu0 0
      %2206 = vmatprep.subr.bf16.mxu0 0
      %2207 = vmatpush1.bf16.msra.mxu0 0
      %2208 = vmatprep.subr.bf16.mxu0 0
      %2209 = vmatpush1.bf16.msra.mxu0 0
      %2210 = vmatprep.subr.bf16.mxu0 0
      %2211 = vmatpush1.bf16.msra.mxu0 0
      %2212 = vmatprep.subr.bf16.mxu0 0
      %2213 = vmatpush1.bf16.msra.mxu0 0
      %2214 = vmatprep.subr.bf16.mxu0 0
      %2215 = vmatpush1.bf16.msra.mxu0 0
      %2216 = vmatprep.subr.bf16.mxu0 0
      %2217 = vmatpush1.bf16.msra.mxu0 0
      %2218 = vmatprep.subr.bf16.mxu0 0
      %2219 = vmatpush1.bf16.msra.mxu0 0
      %2220 = vmatprep.subr.bf16.mxu0 0
      %2221 = vmatpush1.bf16.msra.mxu0 0
      %2222 = vmatprep.subr.bf16.mxu0 0
      %2223 = vmatpush1.bf16.msra.mxu0 0
      %2224 = vmatprep.subr.bf16.mxu0 0
      %2225 = vmatpush1.bf16.msra.mxu0 0
      %2226 = vmatprep.subr.bf16.mxu0 0
      %2227 = vmatpush1.bf16.msra.mxu0 0
      %2228 = vmatprep.subr.bf16.mxu0 0
      %2229 = vmatpush1.bf16.msra.mxu0 0
      %2230 = vmatprep.subr.bf16.mxu0 0
      %2231 = vmatpush1.bf16.msra.mxu0 0
      %2232 = vmatprep.mubr.bf16.mxu0 0
      %2233 = vmatmul.mubr.bf16.gmra.mrb[0].mxu0 %v456
      %v2234 = vpop.f32.mrb[0].mxu0
      %v2235 = vadd.f32 %v2195, %v2234
      %v2236 = vpop.f32.mrb[0].mxu0
      %v2237 = vpop.f32.mrb[0].mxu0
      %v2238 = vadd.f32 %v2195, %v2237
      %v2239 = vpop.f32.mrb[0].mxu0
      %2240 = vmatprep.mubr.bf16.mxu0 0
      %2241 = vmatmul.mubr.bf16.gmra.mrb[0].mxu0 %v459
      %v2242 = vpop.f32.mrb[0].mxu0
      %v2243 = vadd.f32 %v2195, %v2242
      %v2244 = vpop.f32.mrb[0].mxu0
      %v2245 = vpop.f32.mrb[0].mxu0
      %v2246 = vadd.f32 %v2195, %v2245
      %v2247 = vpop.f32.mrb[0].mxu0
      %2248 = vmatprep.mubr.bf16.mxu0 0
      %2249 = vmatmul.mubr.bf16.gmra.mrb[0].mxu0 %v462
      %v2250 = vpop.f32.mrb[0].mxu0
      %v2251 = vadd.f32 %v2195, %v2250
      %v2252 = vpop.f32.mrb[0].mxu0
      %v2253 = vpop.f32.mrb[0].mxu0
      %v2254 = vadd.f32 %v2195, %v2253
      %v2255 = vpop.f32.mrb[0].mxu0
      %2256 = vmatprep.mubr.bf16.mxu0 0
      %2257 = vmatmul.mubr.bf16.gmra.mrb[0].mxu0 %v465
      %v2258 = vpop.f32.mrb[0].mxu0
      %v2259 = vadd.f32 %v2195, %v2258
      %v2260 = vpop.f32.mrb[0].mxu0
      %v2261 = vpop.f32.mrb[0].mxu0
      %v2262 = vadd.f32 %v2195, %v2261
      %v2263 = vpop.f32.mrb[0].mxu0
      %2264 = vmatprep.mubr.bf16.mxu0 0
      %2265 = vmatmul.mubr.bf16.gmra.mrb[0].mxu0 %v468
      %v2266 = vpop.f32.mrb[0].mxu0
      %v2267 = vadd.f32 %v2195, %v2266
      %v2268 = vpop.f32.mrb[0].mxu0
      %v2269 = vpop.f32.mrb[0].mxu0
      %v2270 = vadd.f32 %v2195, %v2269
      %v2271 = vpop.f32.mrb[0].mxu0
      %2272 = vmatprep.mubr.bf16.mxu0 0
      %2273 = vmatmul.mubr.bf16.gmra.mrb[0].mxu0 %v471
      %v2274 = vpop.f32.mrb[0].mxu0
      %v2275 = vadd.f32 %v2195, %v2274
      %v2276 = vpop.f32.mrb[0].mxu0
      %v2277 = vpop.f32.mrb[0].mxu0
      %v2278 = vadd.f32 %v2195, %v2277
      %v2279 = vpop.f32.mrb[0].mxu0
      %2280 = vmatprep.mubr.bf16.mxu0 0
      %2281 = vmatmul.mubr.bf16.gmra.mrb[0].mxu0 %v474
      %v2282 = vpop.f32.mrb[0].mxu0
      %v2283 = vadd.f32 %v2195, %v2282
      %v2284 = vpop.f32.mrb[0].mxu0
      %v2285 = vpop.f32.mrb[0].mxu0
      %v2286 = vadd.f32 %v2195, %v2285
      %v2287 = vpop.f32.mrb[0].mxu0
      %2288 = vmatprep.mubr.bf16.mxu0 0
      %2289 = vmatmul.mubr.bf16.gmra.mrb[0].mxu0 %v477
      %v2290 = vpop.f32.mrb[0].mxu0
      %v2291 = vadd.f32 %v2195, %v2290
      %v2292 = vpop.f32.mrb[0].mxu0
      %v2293 = vpop.f32.mrb[0].mxu0
      %v2294 = vadd.f32 %v2195, %v2293
      %v2295 = vpop.f32.mrb[0].mxu0
      %2296 = vmatprep.mubr.bf16.mxu0 0
      %2297 = vmatmul.mubr.bf16.gmra.mrb[0].mxu0 %v480
      %v2298 = vpop.f32.mrb[0].mxu0
      %v2299 = vadd.f32 %v2195, %v2298
      %v2300 = vpop.f32.mrb[0].mxu0
      %v2301 = vpop.f32.mrb[0].mxu0
      %v2302 = vadd.f32 %v2195, %v2301
      %v2303 = vpop.f32.mrb[0].mxu0
      %2304 = vmatprep.mubr.bf16.mxu0 0
      %2305 = vmatmul.mubr.bf16.gmra.mrb[0].mxu0 %v483
      %v2306 = vpop.f32.mrb[0].mxu0
      %v2307 = vadd.f32 %v2195, %v2306
      %v2308 = vpop.f32.mrb[0].mxu0
      %v2309 = vpop.f32.mrb[0].mxu0
      %v2310 = vadd.f32 %v2195, %v2309
      %v2311 = vpop.f32.mrb[0].mxu0
      %2312 = vmatprep.mubr.bf16.mxu0 0
      %2313 = vmatmul.mubr.bf16.gmra.mrb[0].mxu0 %v486
      %v2314 = vpop.f32.mrb[0].mxu0
      %v2315 = vadd.f32 %v2195, %v2314
      %v2316 = vpop.f32.mrb[0].mxu0
      %v2317 = vpop.f32.mrb[0].mxu0
      %v2318 = vadd.f32 %v2195, %v2317
      %v2319 = vpop.f32.mrb[0].mxu0
      %2320 = vmatprep.mubr.bf16.mxu0 0
      %2321 = vmatmul.mubr.bf16.gmra.mrb[0].mxu0 %v489
      %v2322 = vpop.f32.mrb[0].mxu0
      %v2323 = vadd.f32 %v2195, %v2322
      %v2324 = vpop.f32.mrb[0].mxu0
      %v2325 = vpop.f32.mrb[0].mxu0
      %v2326 = vadd.f32 %v2195, %v2325
      %v2327 = vpop.f32.mrb[0].mxu0
      %2328 = vmatprep.mubr.bf16.mxu0 0
      %2329 = vmatmul.mubr.bf16.gmra.mrb[0].mxu0 %v492
      %v2330 = vpop.f32.mrb[0].mxu0
      %v2331 = vadd.f32 %v2195, %v2330
      %v2332 = vpop.f32.mrb[0].mxu0
      %v2333 = vpop.f32.mrb[0].mxu0
      %v2334 = vadd.f32 %v2195, %v2333
      %v2335 = vpop.f32.mrb[0].mxu0
      %2336 = vmatprep.mubr.bf16.mxu0 0
      %2337 = vmatmul.mubr.bf16.gmra.mrb[0].mxu0 %v495
      %v2338 = vpop.f32.mrb[0].mxu0
      %v2339 = vadd.f32 %v2195, %v2338
      %v2340 = vpop.f32.mrb[0].mxu0
      %v2341 = vpop.f32.mrb[0].mxu0
      %v2342 = vadd.f32 %v2195, %v2341
      %v2343 = vpop.f32.mrb[0].mxu0
      %2344 = vmatprep.mubr.bf16.mxu0 0
      %2345 = vmatmul.mubr.bf16.gmra.mrb[0].mxu0 %v498
      %v2346 = vpop.f32.mrb[0].mxu0
      %v2347 = vadd.f32 %v2195, %v2346
      %v2348 = vpop.f32.mrb[0].mxu0
      %v2349 = vpop.f32.mrb[0].mxu0
      %v2350 = vadd.f32 %v2195, %v2349
      %v2351 = vpop.f32.mrb[0].mxu0
      %2352 = vmatprep.mubr.bf16.mxu0 0
      %2353 = vmatmul.mubr.bf16.gmra.mrb[0].mxu0 %v501
      %v2354 = vpop.f32.mrb[0].mxu0
      %v2355 = vadd.f32 %v2195, %v2354
      %v2356 = vpop.f32.mrb[0].mxu0
      %v2357 = vpop.f32.mrb[0].mxu0
      %v2358 = vadd.f32 %v2195, %v2357
      %v2359 = vpop.f32.mrb[0].mxu0
      %2360 = vdwg.mxu0
      %v2361 = vld [vmem:[%s5] sm:$0x3]
      %v2362 = vld [vmem:[%s6] sm:$0x1]
      %v2364 = vlaneseq
      %v2365 = vshrl.u32 %v2364, 7
      %v2366 = vsub.s32 0, %v2365
      %v2367 = vrot.slane %v2362, %v2366
      %v2370 = vsel %vm454, %v2173, 0
      %v2373 = vsel %vm454, %v2174, 0
      %v2376 = vsel %vm454, %v2175, 0
      %v2379 = vsel %vm454, %v2176, 0
      %v2382 = vsel %vm454, %v2177, 0
      %v2385 = vsel %vm454, %v2178, 0
      %v2388 = vsel %vm454, %v2179, 0
      %v2391 = vsel %vm454, %v2180, 0
      %v2394 = vsel %vm454, %v2181, 0
      %v2397 = vsel %vm454, %v2182, 0
      %v2400 = vsel %vm454, %v2183, 0
      %v2403 = vsel %vm454, %v2184, 0
      %v2406 = vsel %vm454, %v2185, 0
      %v2409 = vsel %vm454, %v2186, 0
      %v2412 = vsel %vm454, %v2187, 0
      %v2415 = vsel %vm454, %v2188, 0
      %v2418 = vsel %vm503, %v2361, 0
      %2420 = vmatprep.subr.bf16.mxu0 0
      %2421 = vmatpush1.bf16.msra.mxu0 %v2418
      %2422 = vmatprep.subr.bf16.mxu0 0
      %2423 = vmatpush1.bf16.msra.mxu0 0
      %2424 = vmatprep.subr.bf16.mxu0 0
      %2425 = vmatpush1.bf16.msra.mxu0 0
      %2426 = vmatprep.subr.bf16.mxu0 0
      %2427 = vmatpush1.bf16.msra.mxu0 0
      %2428 = vmatprep.subr.bf16.mxu0 0
      %2429 = vmatpush1.bf16.msra.mxu0 0
      %2430 = vmatprep.subr.bf16.mxu0 0
      %2431 = vmatpush1.bf16.msra.mxu0 0
      %2432 = vmatprep.subr.bf16.mxu0 0
      %2433 = vmatpush1.bf16.msra.mxu0 0
      %2434 = vmatprep.subr.bf16.mxu0 0
      %2435 = vmatpush1.bf16.msra.mxu0 0
      %2436 = vmatprep.subr.bf16.mxu0 0
      %2437 = vmatpush1.bf16.msra.mxu0 0
      %2438 = vmatprep.subr.bf16.mxu0 0
      %2439 = vmatpush1.bf16.msra.mxu0 0
      %2440 = vmatprep.subr.bf16.mxu0 0
      %2441 = vmatpush1.bf16.msra.mxu0 0
      %2442 = vmatprep.subr.bf16.mxu0 0
      %2443 = vmatpush1.bf16.msra.mxu0 0
      %2444 = vmatprep.subr.bf16.mxu0 0
      %2445 = vmatpush1.bf16.msra.mxu0 0
      %2446 = vmatprep.subr.bf16.mxu0 0
      %2447 = vmatpush1.bf16.msra.mxu0 0
      %2448 = vmatprep.subr.bf16.mxu0 0
      %2449 = vmatpush1.bf16.msra.mxu0 0
      %2450 = vmatprep.subr.bf16.mxu0 0
      %2451 = vmatpush1.bf16.msra.mxu0 0
      %2452 = vmatprep.mubr.bf16.mxu0 0
      %2453 = vmatmul.mubr.bf16.gmra.mrb[0].mxu0 %v2370
      %v2454 = vpop.f32.mrb[0].mxu0
      %v2455 = vadd.f32 %v2367, %v2454
      %v2456 = vpop.f32.mrb[0].mxu0
      %v2457 = vpop.f32.mrb[0].mxu0
      %v2458 = vadd.f32 %v2367, %v2457
      %v2459 = vpop.f32.mrb[0].mxu0
      %2460 = vmatprep.mubr.bf16.mxu0 0
      %2461 = vmatmul.mubr.bf16.gmra.mrb[0].mxu0 %v2373
      %v2462 = vpop.f32.mrb[0].mxu0
      %v2463 = vadd.f32 %v2367, %v2462
      %v2464 = vpop.f32.mrb[0].mxu0
      %v2465 = vpop.f32.mrb[0].mxu0
      %v2466 = vadd.f32 %v2367, %v2465
      %v2467 = vpop.f32.mrb[0].mxu0
      %2468 = vmatprep.mubr.bf16.mxu0 0
      %2469 = vmatmul.mubr.bf16.gmra.mrb[0].mxu0 %v2376
      %v2470 = vpop.f32.mrb[0].mxu0
      %v2471 = vadd.f32 %v2367, %v2470
      %v2472 = vpop.f32.mrb[0].mxu0
      %v2473 = vpop.f32.mrb[0].mxu0
      %v2474 = vadd.f32 %v2367, %v2473
      %v2475 = vpop.f32.mrb[0].mxu0
      %2476 = vmatprep.mubr.bf16.mxu0 0
      %2477 = vmatmul.mubr.bf16.gmra.mrb[0].mxu0 %v2379
      %v2478 = vpop.f32.mrb[0].mxu0
      %v2479 = vadd.f32 %v2367, %v2478
      %v2480 = vpop.f32.mrb[0].mxu0
      %v2481 = vpop.f32.mrb[0].mxu0
      %v2482 = vadd.f32 %v2367, %v2481
      %v2483 = vpop.f32.mrb[0].mxu0
      %2484 = vmatprep.mubr.bf16.mxu0 0
      %2485 = vmatmul.mubr.bf16.gmra.mrb[0].mxu0 %v2382
      %v2486 = vpop.f32.mrb[0].mxu0
      %v2487 = vadd.f32 %v2367, %v2486
      %v2488 = vpop.f32.mrb[0].mxu0
      %v2489 = vpop.f32.mrb[0].mxu0
      %v2490 = vadd.f32 %v2367, %v2489
      %v2491 = vpop.f32.mrb[0].mxu0
      %2492 = vmatprep.mubr.bf16.mxu0 0
      %2493 = vmatmul.mubr.bf16.gmra.mrb[0].mxu0 %v2385
      %v2494 = vpop.f32.mrb[0].mxu0
      %v2495 = vadd.f32 %v2367, %v2494
      %v2496 = vpop.f32.mrb[0].mxu0
      %v2497 = vpop.f32.mrb[0].mxu0
      %v2498 = vadd.f32 %v2367, %v2497
      %v2499 = vpop.f32.mrb[0].mxu0
      %2500 = vmatprep.mubr.bf16.mxu0 0
      %2501 = vmatmul.mubr.bf16.gmra.mrb[0].mxu0 %v2388
      %v2502 = vpop.f32.mrb[0].mxu0
      %v2503 = vadd.f32 %v2367, %v2502
      %v2504 = vpop.f32.mrb[0].mxu0
      %v2505 = vpop.f32.mrb[0].mxu0
      %v2506 = vadd.f32 %v2367, %v2505
      %v2507 = vpop.f32.mrb[0].mxu0
      %2508 = vmatprep.mubr.bf16.mxu0 0
      %2509 = vmatmul.mubr.bf16.gmra.mrb[0].mxu0 %v2391
      %v2510 = vpop.f32.mrb[0].mxu0
      %v2511 = vadd.f32 %v2367, %v2510
      %v2512 = vpop.f32.mrb[0].mxu0
      %v2513 = vpop.f32.mrb[0].mxu0
      %v2514 = vadd.f32 %v2367, %v2513
      %v2515 = vpop.f32.mrb[0].mxu0
      %2516 = vmatprep.mubr.bf16.mxu0 0
      %2517 = vmatmul.mubr.bf16.gmra.mrb[0].mxu0 %v2394
      %v2518 = vpop.f32.mrb[0].mxu0
      %v2519 = vadd.f32 %v2367, %v2518
      %v2520 = vpop.f32.mrb[0].mxu0
      %v2521 = vpop.f32.mrb[0].mxu0
      %v2522 = vadd.f32 %v2367, %v2521
      %v2523 = vpop.f32.mrb[0].mxu0
      %2524 = vmatprep.mubr.bf16.mxu0 0
      %2525 = vmatmul.mubr.bf16.gmra.mrb[0].mxu0 %v2397
      %v2526 = vpop.f32.mrb[0].mxu0
      %v2527 = vadd.f32 %v2367, %v2526
      %v2528 = vpop.f32.mrb[0].mxu0
      %v2529 = vpop.f32.mrb[0].mxu0
      %v2530 = vadd.f32 %v2367, %v2529
      %v2531 = vpop.f32.mrb[0].mxu0
      %2532 = vmatprep.mubr.bf16.mxu0 0
      %2533 = vmatmul.mubr.bf16.gmra.mrb[0].mxu0 %v2400
      %v2534 = vpop.f32.mrb[0].mxu0
      %v2535 = vadd.f32 %v2367, %v2534
      %v2536 = vpop.f32.mrb[0].mxu0
      %v2537 = vpop.f32.mrb[0].mxu0
      %v2538 = vadd.f32 %v2367, %v2537
      %v2539 = vpop.f32.mrb[0].mxu0
      %2540 = vmatprep.mubr.bf16.mxu0 0
      %2541 = vmatmul.mubr.bf16.gmra.mrb[0].mxu0 %v2403
      %v2542 = vpop.f32.mrb[0].mxu0
      %v2543 = vadd.f32 %v2367, %v2542
      %v2544 = vpop.f32.mrb[0].mxu0
      %v2545 = vpop.f32.mrb[0].mxu0
      %v2546 = vadd.f32 %v2367, %v2545
      %v2547 = vpop.f32.mrb[0].mxu0
      %2548 = vmatprep.mubr.bf16.mxu0 0
      %2549 = vmatmul.mubr.bf16.gmra.mrb[0].mxu0 %v2406
      %v2550 = vpop.f32.mrb[0].mxu0
      %v2551 = vadd.f32 %v2367, %v2550
      %v2552 = vpop.f32.mrb[0].mxu0
      %v2553 = vpop.f32.mrb[0].mxu0
      %v2554 = vadd.f32 %v2367, %v2553
      %v2555 = vpop.f32.mrb[0].mxu0
      %2556 = vmatprep.mubr.bf16.mxu0 0
      %2557 = vmatmul.mubr.bf16.gmra.mrb[0].mxu0 %v2409
      %v2558 = vpop.f32.mrb[0].mxu0
      %v2559 = vadd.f32 %v2367, %v2558
      %v2560 = vpop.f32.mrb[0].mxu0
      %v2561 = vpop.f32.mrb[0].mxu0
      %v2562 = vadd.f32 %v2367, %v2561
      %v2563 = vpop.f32.mrb[0].mxu0
      %2564 = vmatprep.mubr.bf16.mxu0 0
      %2565 = vmatmul.mubr.bf16.gmra.mrb[0].mxu0 %v2412
      %v2566 = vpop.f32.mrb[0].mxu0
      %v2567 = vadd.f32 %v2367, %v2566
      %v2568 = vpop.f32.mrb[0].mxu0
      %v2569 = vpop.f32.mrb[0].mxu0
      %v2570 = vadd.f32 %v2367, %v2569
      %v2571 = vpop.f32.mrb[0].mxu0
      %2572 = vmatprep.mubr.bf16.mxu0 0
      %2573 = vmatmul.mubr.bf16.gmra.mrb[0].mxu0 %v2415
      %v2574 = vpop.f32.mrb[0].mxu0
      %v2575 = vadd.f32 %v2367, %v2574
      %v2576 = vpop.f32.mrb[0].mxu0
      %v2577 = vpop.f32.mrb[0].mxu0
      %v2578 = vadd.f32 %v2367, %v2577
      %v2579 = vpop.f32.mrb[0].mxu0
      %2580 = vdwg.mxu0
      %v2581 = vadd.f32 %v2455, %v2235
      %v2582 = vadd.f32 %v2458, %v2238
      %v2583 = vadd.f32 %v2463, %v2243
      %v2584 = vadd.f32 %v2466, %v2246
      %v2585 = vadd.f32 %v2471, %v2251
      %v2586 = vadd.f32 %v2474, %v2254
      %v2587 = vadd.f32 %v2479, %v2259
      %v2588 = vadd.f32 %v2482, %v2262
      %v2589 = vadd.f32 %v2487, %v2267
      %v2590 = vadd.f32 %v2490, %v2270
      %v2591 = vadd.f32 %v2495, %v2275
      %v2592 = vadd.f32 %v2498, %v2278
      %v2593 = vadd.f32 %v2503, %v2283
      %v2594 = vadd.f32 %v2506, %v2286
      %v2595 = vadd.f32 %v2511, %v2291
      %v2596 = vadd.f32 %v2514, %v2294
      %v2597 = vadd.f32 %v2519, %v2299
      %v2598 = vadd.f32 %v2522, %v2302
      %v2599 = vadd.f32 %v2527, %v2307
      %v2600 = vadd.f32 %v2530, %v2310
      %v2601 = vadd.f32 %v2535, %v2315
      %v2602 = vadd.f32 %v2538, %v2318
      %v2603 = vadd.f32 %v2543, %v2323
      %v2604 = vadd.f32 %v2546, %v2326
      %v2605 = vadd.f32 %v2551, %v2331
      %v2606 = vadd.f32 %v2554, %v2334
      %v2607 = vadd.f32 %v2559, %v2339
      %v2608 = vadd.f32 %v2562, %v2342
      %v2609 = vadd.f32 %v2567, %v2347
      %v2610 = vadd.f32 %v2570, %v2350
      %v2611 = vadd.f32 %v2575, %v2355
      %v2612 = vadd.f32 %v2578, %v2358
      %v2613 = vmax.f32 %v2581, 0.0
      %v2614 = vmax.f32 %v2582, 0.0
      %v2615 = vmax.f32 %v2583, 0.0
      %v2616 = vmax.f32 %v2584, 0.0
      %v2617 = vmax.f32 %v2585, 0.0
      %v2618 = vmax.f32 %v2586, 0.0
      %v2619 = vmax.f32 %v2587, 0.0
      %v2620 = vmax.f32 %v2588, 0.0
      %v2621 = vmax.f32 %v2589, 0.0
      %v2622 = vmax.f32 %v2590, 0.0
      %v2623 = vmax.f32 %v2591, 0.0
      %v2624 = vmax.f32 %v2592, 0.0
      %v2625 = vmax.f32 %v2593, 0.0
      %v2626 = vmax.f32 %v2594, 0.0
      %v2627 = vmax.f32 %v2595, 0.0
      %v2628 = vmax.f32 %v2596, 0.0
      %v2629 = vmax.f32 %v2597, 0.0
      %v2630 = vmax.f32 %v2598, 0.0
      %v2631 = vmax.f32 %v2599, 0.0
      %v2632 = vmax.f32 %v2600, 0.0
      %v2633 = vmax.f32 %v2601, 0.0
      %v2634 = vmax.f32 %v2602, 0.0
      %v2635 = vmax.f32 %v2603, 0.0
      %v2636 = vmax.f32 %v2604, 0.0
      %v2637 = vmax.f32 %v2605, 0.0
      %v2638 = vmax.f32 %v2606, 0.0
      %v2639 = vmax.f32 %v2607, 0.0
      %v2640 = vmax.f32 %v2608, 0.0
      %v2641 = vmax.f32 %v2609, 0.0
      %v2642 = vmax.f32 %v2610, 0.0
      %v2643 = vmax.f32 %v2611, 0.0
      %v2644 = vmax.f32 %v2612, 0.0
      %v2645 = vpack.c.bf16 %v2614, %v2613
      %v2646 = vpack.c.bf16 %v2616, %v2615
      %v2647 = vpack.c.bf16 %v2618, %v2617
      %v2648 = vpack.c.bf16 %v2620, %v2619
      %v2649 = vpack.c.bf16 %v2622, %v2621
      %v2650 = vpack.c.bf16 %v2624, %v2623
      %v2651 = vpack.c.bf16 %v2626, %v2625
      %v2652 = vpack.c.bf16 %v2628, %v2627
      %v2653 = vpack.c.bf16 %v2630, %v2629
      %v2654 = vpack.c.bf16 %v2632, %v2631
      %v2655 = vpack.c.bf16 %v2634, %v2633
      %v2656 = vpack.c.bf16 %v2636, %v2635
      %v2657 = vpack.c.bf16 %v2638, %v2637
      %v2658 = vpack.c.bf16 %v2640, %v2639
      %v2659 = vpack.c.bf16 %v2642, %v2641
      %v2660 = vpack.c.bf16 %v2644, %v2643
      %v2677 = vunpack.c.l.b16 %v2645
      %v2678 = vunpack.c.h.b16 %v2645
      %v2679 = vunpack.c.l.b16 %v2646
      %v2680 = vunpack.c.h.b16 %v2646
      %v2681 = vunpack.c.l.b16 %v2647
      %v2682 = vunpack.c.h.b16 %v2647
      %v2683 = vunpack.c.l.b16 %v2648
      %v2684 = vunpack.c.h.b16 %v2648
      %v2685 = vunpack.c.l.b16 %v2649
      %v2686 = vunpack.c.h.b16 %v2649
      %v2687 = vunpack.c.l.b16 %v2650
      %v2688 = vunpack.c.h.b16 %v2650
      %v2689 = vunpack.c.l.b16 %v2651
      %v2690 = vunpack.c.h.b16 %v2651
      %v2691 = vunpack.c.l.b16 %v2652
      %v2692 = vunpack.c.h.b16 %v2652
      %v2693 = vunpack.c.l.b16 %v2653
      %v2694 = vunpack.c.h.b16 %v2653
      %v2695 = vunpack.c.l.b16 %v2654
      %v2696 = vunpack.c.h.b16 %v2654
      %v2697 = vunpack.c.l.b16 %v2655
      %v2698 = vunpack.c.h.b16 %v2655
      %v2699 = vunpack.c.l.b16 %v2656
      %v2700 = vunpack.c.h.b16 %v2656
      %v2701 = vunpack.c.l.b16 %v2657
      %v2702 = vunpack.c.h.b16 %v2657
      %v2703 = vunpack.c.l.b16 %v2658
      %v2704 = vunpack.c.h.b16 %v2658
      %v2705 = vunpack.c.l.b16 %v2659
      %v2706 = vunpack.c.h.b16 %v2659
      %v2707 = vunpack.c.l.b16 %v2660
      %v2708 = vunpack.c.h.b16 %v2660
      %v2709 = vpack.c.b16 %v2677, %v2677
      %v2710 = vpack.c.b16 %v2678, %v2678
      %v2711 = vpack.c.b16 %v2679, %v2679
      %v2712 = vpack.c.b16 %v2680, %v2680
      %v2713 = vpack.c.b16 %v2681, %v2681
      %v2714 = vpack.c.b16 %v2682, %v2682
      %v2715 = vpack.c.b16 %v2683, %v2683
      %v2716 = vpack.c.b16 %v2684, %v2684
      %v2717 = vpack.c.b16 %v2685, %v2685
      %v2718 = vpack.c.b16 %v2686, %v2686
      %v2719 = vpack.c.b16 %v2687, %v2687
      %v2720 = vpack.c.b16 %v2688, %v2688
      %v2721 = vpack.c.b16 %v2689, %v2689
      %v2722 = vpack.c.b16 %v2690, %v2690
      %v2723 = vpack.c.b16 %v2691, %v2691
      %v2724 = vpack.c.b16 %v2692, %v2692
      %v2725 = vpack.c.b16 %v2693, %v2693
      %v2726 = vpack.c.b16 %v2694, %v2694
      %v2727 = vpack.c.b16 %v2695, %v2695
      %v2728 = vpack.c.b16 %v2696, %v2696
      %v2729 = vpack.c.b16 %v2697, %v2697
      %v2730 = vpack.c.b16 %v2698, %v2698
      %v2731 = vpack.c.b16 %v2699, %v2699
      %v2732 = vpack.c.b16 %v2700, %v2700
      %v2733 = vpack.c.b16 %v2701, %v2701
      %v2734 = vpack.c.b16 %v2702, %v2702
      %v2735 = vpack.c.b16 %v2703, %v2703
      %v2736 = vpack.c.b16 %v2704, %v2704
      %v2737 = vpack.c.b16 %v2705, %v2705
      %v2738 = vpack.c.b16 %v2706, %v2706
      %v2739 = vpack.c.b16 %v2707, %v2707
      %v2740 = vpack.c.b16 %v2708, %v2708
      %vm2773 = vcmask 125952
      %2774 = vst.msk [vmem:[%s332] sm:$0xf] %vm2773, %v2709
      %2775 = vst.msk [vmem:[%s332 + $0x4] sm:$0xf] %vm2773, %v2710
      %2776 = vst.msk [vmem:[%s332 + $0x8] sm:$0xf] %vm2773, %v2711
      %2777 = vst.msk [vmem:[%s332 + $0xc] sm:$0xf] %vm2773, %v2712
      %2778 = vst.msk [vmem:[%s332 + $0x10] sm:$0xf] %vm2773, %v2713
      %2779 = vst.msk [vmem:[%s332 + $0x14] sm:$0xf] %vm2773, %v2714
      %2780 = vst.msk [vmem:[%s332 + $0x18] sm:$0xf] %vm2773, %v2715
      %2781 = vst.msk [vmem:[%s332 + $0x1c] sm:$0xf] %vm2773, %v2716
      %2782 = vst.msk [vmem:[%s332 + $0x20] sm:$0xf] %vm2773, %v2717
      %2783 = vst.msk [vmem:[%s332 + $0x24] sm:$0xf] %vm2773, %v2718
      %2784 = vst.msk [vmem:[%s332 + $0x28] sm:$0xf] %vm2773, %v2719
      %2785 = vst.msk [vmem:[%s332 + $0x2c] sm:$0xf] %vm2773, %v2720
      %2786 = vst.msk [vmem:[%s332 + $0x30] sm:$0xf] %vm2773, %v2721
      %2787 = vst.msk [vmem:[%s332 + $0x34] sm:$0xf] %vm2773, %v2722
      %2788 = vst.msk [vmem:[%s332 + $0x38] sm:$0xf] %vm2773, %v2723
      %2789 = vst.msk [vmem:[%s332 + $0x3c] sm:$0xf] %vm2773, %v2724
      %2790 = vst.msk [vmem:[%s332 + $0x40] sm:$0xf] %vm2773, %v2725
      %2791 = vst.msk [vmem:[%s332 + $0x44] sm:$0xf] %vm2773, %v2726
      %2792 = vst.msk [vmem:[%s332 + $0x48] sm:$0xf] %vm2773, %v2727
      %2793 = vst.msk [vmem:[%s332 + $0x4c] sm:$0xf] %vm2773, %v2728
      %2794 = vst.msk [vmem:[%s332 + $0x50] sm:$0xf] %vm2773, %v2729
      %2795 = vst.msk [vmem:[%s332 + $0x54] sm:$0xf] %vm2773, %v2730
      %2796 = vst.msk [vmem:[%s332 + $0x58] sm:$0xf] %vm2773, %v2731
      %2797 = vst.msk [vmem:[%s332 + $0x5c] sm:$0xf] %vm2773, %v2732
      %2798 = vst.msk [vmem:[%s332 + $0x60] sm:$0xf] %vm2773, %v2733
      %2799 = vst.msk [vmem:[%s332 + $0x64] sm:$0xf] %vm2773, %v2734
      %2800 = vst.msk [vmem:[%s332 + $0x68] sm:$0xf] %vm2773, %v2735
      %2801 = vst.msk [vmem:[%s332 + $0x6c] sm:$0xf] %vm2773, %v2736
      %2802 = vst.msk [vmem:[%s332 + $0x70] sm:$0xf] %vm2773, %v2737
      %2803 = vst.msk [vmem:[%s332 + $0x74] sm:$0xf] %vm2773, %v2738
      %2804 = vst.msk [vmem:[%s332 + $0x78] sm:$0xf] %vm2773, %v2739
      %2805 = vst.msk [vmem:[%s332 + $0x7c] sm:$0xf] %vm2773, %v2740
      %p2806 = scmp.lt.s32.totalorder %s20, 1
      %s2807 = scalar_select %p2806, %s20, 1
      %s2808 = smul.addr %s2807, 32
      %s2809 = smul.addr %s2808, 4
      %s2810 = scalar_lea.vmem %s9, %s2809
      // Predicated region
      $region57: #{bottleneck_forward.1} parent=55 // pred_check
        %p2811 = pneg %p232
      $region58: #{bottleneck_forward.1} parent=55 // pred_check_branch
        %2813 = sbr.rel (%p2811) target = $region60
      $region59: #{bottleneck_forward.1} parent=55 // pred_region
        _
      $region60: #{bottleneck_forward.1} parent=55 // pred_fallthru
        _
    $region56: #{bottleneck_forward.1} parent=5 // pred_fallthru
      _
    %p2814 = scmp.le.s32.totalorder 2, %s15
    // Predicated region
    $region61: #{bottleneck_forward.1} parent=5 // pred_check
      %p2815 = pneg %p2814
    $region62: #{bottleneck_forward.1} parent=5 // pred_check_branch
      %2817 = sbr.rel (%p2815) target = $region64
    $region63: #{bottleneck_forward.1} parent=5 // pred_region
      %s2818 = ssub.s32 %s15, 2
      // Predicated region
      $region65: #{bottleneck_forward.1} parent=63 // pred_check
        %p2819 = pneg %p238
      $region66: #{bottleneck_forward.1} parent=63 // pred_check_branch
        %2821 = sbr.rel (%p2819) target = $region68
      $region67: #{bottleneck_forward.1} parent=63 // pred_region
        %p2822 = scmp.lt.s32.totalorder %s21, 1
        %s2823 = scalar_select %p2822, %s21, 1
        %s2824 = smul.addr %s2823, 32
        %s2825 = smul.addr %s2824, 4
        %s2826 = scalar_lea.vmem %s9, %s2825
      $region68: #{bottleneck_forward.1} parent=63 // pred_fallthru
        _
    $region64: #{bottleneck_forward.1} parent=5 // pred_fallthru
      _
  $region6: #{bottleneck_forward.1} parent=0 // loop_footer
    %s19 = sadd.s32 1, %s15
  $region7: #{bottleneck_forward.1} parent=0 // loop_footer_branch
    %14 = sbr.rel target = $region3
  $region8: #{bottleneck_forward.1} parent=0 // loop_exit
    _

</llo_original>
